<compile_context>
chip_gen: v5e
topology: v5e:2x2
jax: 0.10.0
libtpu: 0.0.40
codegen_flags: <defaults>
</compile_context>

<pallas_src>
import functools

import jax
import jax.numpy as jnp
from jax import lax
from jax.experimental import pallas as pl
from jax.experimental.pallas import tpu as pltpu


def _round_up(x, m):
    return (x + m - 1) // m * m


def _cdiv(a, b):
    return (a + b - 1) // b


# ----------------------------- Pallas kernel --------------------------------
def _conv_bn_relu_kernel(x_cur_ref, x_hal_ref, w_ref, b_ref, o_ref, ks_ref,
                         *, offsets, kc, tile_m):
    # x_cur_ref: (1, 8*Cin, TILE_M)  bf16  current lane tile of the phase stack
    # x_hal_ref: (1, 8*Cin, HALO)    bf16  first HALO lanes of the next tile
    # w_ref:     (Cout, 64*Cin)      bf16  per-offset weight blocks, concat on K
    # b_ref:     (Cout, 1)           f32   fused conv bias + BN shift
    # o_ref:     (1, Cout, TILE_M)   bf16  output tile (lane-dense)
    # ks_ref:    (64*Cin, TILE_M)    bf16  K-stacked shifted input (scratch)

    # Build the K-stacked, lane-shifted operand once (explicit single-pass
    # shift; 8 static offsets, unrolled).
    for s, off in enumerate(offsets):
        lo, hi = s * kc, (s + 1) * kc
        if off == 0:
            ks_ref[lo:hi, :] = x_cur_ref[0]
        else:
            if off < tile_m:
                ks_ref[lo:hi, :tile_m - off] = x_cur_ref[0, :, off:]
            ks_ref[lo:hi, tile_m - off:] = x_hal_ref[0, :, :off]

    # Single MXU call: sum over the 8 offsets happens inside the K dimension.
    acc = jnp.dot(w_ref[...], ks_ref[...], preferred_element_type=jnp.float32)
    y = acc + b_ref[...]                       # (Cout,1) broadcast over lanes
    o_ref[0] = jnp.maximum(y, 0.0).astype(o_ref.dtype)


def _conv_bn_relu_call(x_all, w_all, bias, *, cout, tile_m, halo, num_m, offsets):
    n, kc, lpad = x_all.shape
    ratio = tile_m // halo                      # tile_m is a multiple of halo
    m_padded = num_m * tile_m

    kernel = functools.partial(_conv_bn_relu_kernel,
                               offsets=offsets, kc=kc, tile_m=tile_m)

    # Advisory cost hint for XLA scheduling around the custom call.
    flops = 2 * n * num_m * cout * (8 * kc) * tile_m
    bytes_accessed = (n * num_m * kc * (tile_m + halo) * 2        # input + halo
                      + n * num_m * (cout * 8 * kc * 2 + cout * 4)  # w + bias
                      + n * cout * m_padded * 2)                  # bf16 output

    # 2x double-buffered input/halo/output blocks + weights + K-stack scratch.
    vmem_est = (2 * kc * (tile_m + halo) * 2
                + 2 * cout * tile_m * 2
                + cout * 8 * kc * 2
                + 8 * kc * tile_m * 2
                + (4 << 20))
    vmem_limit = int(min(max(vmem_est, 32 << 20), 96 << 20))

    return pl.pallas_call(
        kernel,
        out_shape=jax.ShapeDtypeStruct((n, cout, m_padded), jnp.bfloat16),
        grid=(n, num_m),
        in_specs=[
            pl.BlockSpec((1, kc, tile_m), lambda i, j: (i, 0, j)),
            pl.BlockSpec((1, kc, halo), lambda i, j: (i, 0, (j + 1) * ratio)),
            pl.BlockSpec(w_all.shape, lambda i, j: (0, 0)),
            pl.BlockSpec(bias.shape, lambda i, j: (0, 0)),
        ],
        out_specs=pl.BlockSpec((1, cout, tile_m), lambda i, j: (i, 0, j)),
        scratch_shapes=[pltpu.VMEM((8 * kc, tile_m), jnp.bfloat16)],
        compiler_params=pltpu.CompilerParams(
            dimension_semantics=("parallel", "parallel"),
            vmem_limit_bytes=vmem_limit),
        cost_estimate=pl.CostEstimate(
            flops=flops, transcendentals=0, bytes_accessed=bytes_accessed),
    )(x_all, x_all, w_all, bias)


# ------------------------------- Wrapper -------------------------------------
def basic_block_forward(x, params, eps=1e-5):
    """x: (N, Cin, D, H, W) f32 -> (N, 2*Cin, Do, Ho, Wo) f32 (NCDHW)."""
    w, b, gamma, beta, rmean, rvar = (
        params["w"], params["b"], params["gamma"], params["beta"],
        params["running_mean"], params["running_var"])
    cout, cin = w.shape[0], w.shape[1]
    n, _, d, h, wdim = x.shape
    do, ho, wo = (d - 1) // 2 + 1, (h - 1) // 2 + 1, (wdim - 1) // 2 + 1
    dq, hq, wq = do + 1, ho + 1, wo + 1
    lq = dq * hq * wq

    # ---- fold eval-mode BN (+ conv bias) into per-channel scale & bias ------
    inv_std = 1.0 / jnp.sqrt(rvar + eps)
    scale = gamma * inv_std                                      # (Cout,)
    bias = (beta + (b - rmean) * scale).reshape(cout, 1).astype(jnp.float32)
    w_scaled = w * scale[:, None, None, None, None]              # (Cout,Cin,3,3,3)

    # ---- repack into 8 stride-2 parity phases (bf16, flattened spatial) -----
    # conv padding of 1 each side + tail padding so every phase has exactly
    # (dq, hq, wq) entries.  Cast to bf16 BEFORE the phase slicing so the
    # wrapper-side repack streams half the bytes.
    xp = jnp.pad(x, ((0, 0), (0, 0),
                     (1, 1 + (2 * do - d)),
                     (1, 1 + (2 * ho - h)),
                     (1, 1 + (2 * wo - wdim)))).astype(jnp.bfloat16)
    phases = [xp[:, :, pd::2, ph::2, pw::2]
              for pd in range(2) for ph in range(2) for pw in range(2)]
    x_all = jnp.stack(phases, axis=1).reshape(n, 8 * cin, lq)    # (N,8*Cin,Lq)

    # ---- M tiling: lane tile = multiple of the (128-aligned) halo block -----
    max_off = hq * wq + wq + 1
    halo = _round_up(max_off, 128)
    desired = max(128, min(1024, _round_up(max(lq // 2, 1), 128)))
    tile_m = halo * max(1, _cdiv(desired, halo))
    if lq > 2 * tile_m and tile_m < 2 * halo:
        tile_m = 2 * halo            # bound halo re-read overhead for big volumes
    num_m = _cdiv(lq, tile_m)
    lpad = num_m * tile_m + halo     # extra zero block feeds only cropped columns
    x_all = jnp.pad(x_all, ((0, 0), (0, 0), (0, lpad - lq)))

    # ---- per-offset weight blocks, concatenated along K (one MXU call) ------
    offsets, blocks = [], []
    for sd in range(2):
        for sh in range(2):
            for sw in range(2):
                offsets.append(sd * hq * wq + sh * wq + sw)
                cols = []
                for pd in range(2):
                    for ph in range(2):
                        for pw in range(2):
                            kd, kh, kw = 2 * sd + pd, 2 * sh + ph, 2 * sw + pw
                            if kd < 3 and kh < 3 and kw < 3:
                                cols.append(w_scaled[:, :, kd, kh, kw])
                            else:
                                cols.append(jnp.zeros((cout, cin),
                                                      w_scaled.dtype))
                blocks.append(jnp.concatenate(cols, axis=1))     # (Cout, 8*Cin)
    w_all = jnp.concatenate(blocks, axis=1).astype(jnp.bfloat16)  # (Cout,64*Cin)

    out_k = _conv_bn_relu_call(x_all, w_all, bias, cout=cout, tile_m=tile_m,
                               halo=halo, num_m=num_m, offsets=tuple(offsets))
    # (N, Cout, M_padded) -> NCDHW: crop garbage columns, reshape, crop phases.
    out = out_k[:, :, :lq].reshape(n, cout, dq, hq, wq)
    return out[:, :, :do, :ho, :wo].astype(jnp.float32)


# ----------------------------- Reference & init -------------------------------
def basic_block_reference(x, params, eps=1e-5):
    """Pure-JAX f32 reference (lax.conv) matching the PyTorch module in eval mode."""
    w, b = params["w"], params["b"]
    y = lax.conv_general_dilated(
        x, w, window_strides=(2, 2, 2), padding=[(1, 1)] * 3,
        dimension_numbers=("NCDHW", "OIDHW", "NCDHW"))
    y = y + b.reshape(1, -1, 1, 1, 1)
    inv_std = 1.0 / jnp.sqrt(params["running_var"] + eps)
    y = (y - params["running_mean"].reshape(1, -1, 1, 1, 1)) * \
        (params["gamma"] * inv_std).reshape(1, -1, 1, 1, 1) + \
        params["beta"].reshape(1, -1, 1, 1, 1)
    return jnp.maximum(y, 0.0)


def init_params(key, in_channels):
    out_channels = in_channels * 2
    k_w, k_b, k_g, k_be, k_m, k_v = jax.random.split(key, 6)
    fan_in = in_channels * 27
    bound = 1.0 / jnp.sqrt(fan_in)
    return {
        "w": jax.random.uniform(k_w, (out_channels, in_channels, 3, 3, 3),
                                jnp.float32, -bound, bound),
        "b": jax.random.uniform(k_b, (out_channels,), jnp.float32, -bound, bound),
        "gamma": 1.0 + 0.1 * jax.random.normal(k_g, (out_channels,), jnp.float32),
        "beta": 0.1 * jax.random.normal(k_be, (out_channels,), jnp.float32),
        "running_mean": 0.1 * jax.random.normal(k_m, (out_channels,), jnp.float32),
        "running_var": 1.0 + 0.1 * jax.random.uniform(k_v, (out_channels,),
                                                      jnp.float32, 0.0, 1.0),
    }


if __name__ == "__main__":
    key = jax.random.PRNGKey(0)
    k_x, k_p = jax.random.split(key)

    N, Cin, D, H, W = 2, 4, 16, 16, 16
    x = jax.random.normal(k_x, (N, Cin, D, H, W), jnp.float32)
    params = init_params(k_p, Cin)

    out = jax.block_until_ready(jax.jit(basic_block_forward)(x, params))
    ref = jax.block_until_ready(basic_block_reference(x, params))

    assert out.shape == (N, 2 * Cin, D // 2, H // 2, W // 2), out.shape
    # bf16 MXU operands / bf16 output with f32 accumulation -> loosened tolerance.
    max_err = float(jnp.max(jnp.abs(out - ref)))
    assert jnp.allclose(out, ref, rtol=3e-2, atol=3e-2), max_err

    print("KERNEL_OK")
</pallas_src>

<mosaic_0001>
module attributes {stable_mosaic.version = 11 : i64} {
  func.func @_conv_bn_relu_kernel(%arg0: i32, %arg1: i32, %arg2: memref<1x32x384xbf16, #tpu.memory_space<vmem>>, %arg3: memref<1x32x128xbf16, #tpu.memory_space<vmem>>, %arg4: memref<8x256xbf16, #tpu.memory_space<vmem>>, %arg5: memref<8x1xf32, #tpu.memory_space<vmem>>, %arg6: memref<1x8x384xbf16, #tpu.memory_space<vmem>>, %arg7: memref<256x384xbf16, #tpu.memory_space<vmem>>) attributes {dimension_semantics = [#tpu.dimension_semantics<parallel>, #tpu.dimension_semantics<parallel>], iteration_bounds = array<i64: 2, 2>, scalar_prefetch = 0 : i64, scratch_operands = 1 : i64, tpu.core_type = #tpu.core_type<tc>, window_params = [{transform_indices = @transform_0, window_bounds = array<i64: 1, 32, 384>}, {transform_indices = @transform_1, window_bounds = array<i64: 1, 32, 128>}, {pipeline_mode = #tpu.pipeline_mode<synchronous>, transform_indices = @transform_2, window_bounds = array<i64: 8, 256>}, {pipeline_mode = #tpu.pipeline_mode<synchronous>, transform_indices = @transform_3, window_bounds = array<i64: 8, 1>}, {transform_indices = @transform_4, window_bounds = array<i64: 1, 8, 384>}]} {
    %c0 = arith.constant 0 : index
    %c0_0 = arith.constant 0 : index
    %c0_1 = arith.constant 0 : index
    %0 = vector.load %arg2[%c0, %c0_0, %c0_1] : memref<1x32x384xbf16, #tpu.memory_space<vmem>>, vector<1x32x384xbf16>
    %1 = vector.shape_cast %0 : vector<1x32x384xbf16> to vector<32x384xbf16>
    %c0_2 = arith.constant 0 : index
    %c0_3 = arith.constant 0 : index
    %2 = vector.load %arg7[%c0_2, %c0_3] : memref<256x384xbf16, #tpu.memory_space<vmem>>, vector<32x384xbf16>
    tpu.vector_store %arg7[%c0_2, %c0_3], %1 {strides = array<i32>} : memref<256x384xbf16, #tpu.memory_space<vmem>>, vector<32x384xbf16>,
    %c0_4 = arith.constant 0 : index
    %c0_5 = arith.constant 0 : index
    %c1 = arith.constant 1 : index
    %3 = vector.load %arg2[%c0_4, %c0_5, %c1] : memref<1x32x384xbf16, #tpu.memory_space<vmem>>, vector<1x32x383xbf16>
    %4 = vector.shape_cast %3 : vector<1x32x383xbf16> to vector<32x383xbf16>
    %c32 = arith.constant 32 : index
    %c0_6 = arith.constant 0 : index
    %5 = vector.load %arg7[%c32, %c0_6] : memref<256x384xbf16, #tpu.memory_space<vmem>>, vector<32x383xbf16>
    tpu.vector_store %arg7[%c32, %c0_6], %4 {strides = array<i32>} : memref<256x384xbf16, #tpu.memory_space<vmem>>, vector<32x383xbf16>,
    %c0_7 = arith.constant 0 : index
    %c0_8 = arith.constant 0 : index
    %c0_9 = arith.constant 0 : index
    %6 = vector.load %arg3[%c0_7, %c0_8, %c0_9] : memref<1x32x128xbf16, #tpu.memory_space<vmem>>, vector<1x32x1xbf16>
    %7 = vector.shape_cast %6 : vector<1x32x1xbf16> to vector<32x1xbf16>
    %c32_10 = arith.constant 32 : index
    %c383 = arith.constant 383 : index
    %8 = vector.load %arg7[%c32_10, %c383] : memref<256x384xbf16, #tpu.memory_space<vmem>>, vector<32x1xbf16>
    tpu.vector_store %arg7[%c32_10, %c383], %7 {strides = array<i32>} : memref<256x384xbf16, #tpu.memory_space<vmem>>, vector<32x1xbf16>,
    %c0_11 = arith.constant 0 : index
    %c0_12 = arith.constant 0 : index
    %c9 = arith.constant 9 : index
    %9 = vector.load %arg2[%c0_11, %c0_12, %c9] : memref<1x32x384xbf16, #tpu.memory_space<vmem>>, vector<1x32x375xbf16>
    %10 = vector.shape_cast %9 : vector<1x32x375xbf16> to vector<32x375xbf16>
    %c64 = arith.constant 64 : index
    %c0_13 = arith.constant 0 : index
    %11 = vector.load %arg7[%c64, %c0_13] : memref<256x384xbf16, #tpu.memory_space<vmem>>, vector<32x375xbf16>
    tpu.vector_store %arg7[%c64, %c0_13], %10 {strides = array<i32>} : memref<256x384xbf16, #tpu.memory_space<vmem>>, vector<32x375xbf16>,
    %c0_14 = arith.constant 0 : index
    %c0_15 = arith.constant 0 : index
    %c0_16 = arith.constant 0 : index
    %12 = vector.load %arg3[%c0_14, %c0_15, %c0_16] : memref<1x32x128xbf16, #tpu.memory_space<vmem>>, vector<1x32x9xbf16>
    %13 = vector.shape_cast %12 : vector<1x32x9xbf16> to vector<32x9xbf16>
    %c64_17 = arith.constant 64 : index
    %c375 = arith.constant 375 : index
    %14 = vector.load %arg7[%c64_17, %c375] : memref<256x384xbf16, #tpu.memory_space<vmem>>, vector<32x9xbf16>
    tpu.vector_store %arg7[%c64_17, %c375], %13 {strides = array<i32>} : memref<256x384xbf16, #tpu.memory_space<vmem>>, vector<32x9xbf16>,
    %c0_18 = arith.constant 0 : index
    %c0_19 = arith.constant 0 : index
    %c10 = arith.constant 10 : index
    %15 = vector.load %arg2[%c0_18, %c0_19, %c10] : memref<1x32x384xbf16, #tpu.memory_space<vmem>>, vector<1x32x374xbf16>
    %16 = vector.shape_cast %15 : vector<1x32x374xbf16> to vector<32x374xbf16>
    %c96 = arith.constant 96 : index
    %c0_20 = arith.constant 0 : index
    %17 = vector.load %arg7[%c96, %c0_20] : memref<256x384xbf16, #tpu.memory_space<vmem>>, vector<32x374xbf16>
    tpu.vector_store %arg7[%c96, %c0_20], %16 {strides = array<i32>} : memref<256x384xbf16, #tpu.memory_space<vmem>>, vector<32x374xbf16>,
    %c0_21 = arith.constant 0 : index
    %c0_22 = arith.constant 0 : index
    %c0_23 = arith.constant 0 : index
    %18 = vector.load %arg3[%c0_21, %c0_22, %c0_23] : memref<1x32x128xbf16, #tpu.memory_space<vmem>>, vector<1x32x10xbf16>
    %19 = vector.shape_cast %18 : vector<1x32x10xbf16> to vector<32x10xbf16>
    %c96_24 = arith.constant 96 : index
    %c374 = arith.constant 374 : index
    %20 = vector.load %arg7[%c96_24, %c374] : memref<256x384xbf16, #tpu.memory_space<vmem>>, vector<32x10xbf16>
    tpu.vector_store %arg7[%c96_24, %c374], %19 {strides = array<i32>} : memref<256x384xbf16, #tpu.memory_space<vmem>>, vector<32x10xbf16>,
    %c0_25 = arith.constant 0 : index
    %c0_26 = arith.constant 0 : index
    %c81 = arith.constant 81 : index
    %21 = vector.load %arg2[%c0_25, %c0_26, %c81] : memref<1x32x384xbf16, #tpu.memory_space<vmem>>, vector<1x32x303xbf16>
    %22 = vector.shape_cast %21 : vector<1x32x303xbf16> to vector<32x303xbf16>
    %c128 = arith.constant 128 : index
    %c0_27 = arith.constant 0 : index
    %23 = vector.load %arg7[%c128, %c0_27] : memref<256x384xbf16, #tpu.memory_space<vmem>>, vector<32x303xbf16>
    tpu.vector_store %arg7[%c128, %c0_27], %22 {strides = array<i32>} : memref<256x384xbf16, #tpu.memory_space<vmem>>, vector<32x303xbf16>,
    %c0_28 = arith.constant 0 : index
    %c0_29 = arith.constant 0 : index
    %c0_30 = arith.constant 0 : index
    %24 = vector.load %arg3[%c0_28, %c0_29, %c0_30] : memref<1x32x128xbf16, #tpu.memory_space<vmem>>, vector<1x32x81xbf16>
    %25 = vector.shape_cast %24 : vector<1x32x81xbf16> to vector<32x81xbf16>
    %c128_31 = arith.constant 128 : index
    %c303 = arith.constant 303 : index
    %26 = vector.load %arg7[%c128_31, %c303] : memref<256x384xbf16, #tpu.memory_space<vmem>>, vector<32x81xbf16>
    tpu.vector_store %arg7[%c128_31, %c303], %25 {strides = array<i32>} : memref<256x384xbf16, #tpu.memory_space<vmem>>, vector<32x81xbf16>,
    %c0_32 = arith.constant 0 : index
    %c0_33 = arith.constant 0 : index
    %c82 = arith.constant 82 : index
    %27 = vector.load %arg2[%c0_32, %c0_33, %c82] : memref<1x32x384xbf16, #tpu.memory_space<vmem>>, vector<1x32x302xbf16>
    %28 = vector.shape_cast %27 : vector<1x32x302xbf16> to vector<32x302xbf16>
    %c160 = arith.constant 160 : index
    %c0_34 = arith.constant 0 : index
    %29 = vector.load %arg7[%c160, %c0_34] : memref<256x384xbf16, #tpu.memory_space<vmem>>, vector<32x302xbf16>
    tpu.vector_store %arg7[%c160, %c0_34], %28 {strides = array<i32>} : memref<256x384xbf16, #tpu.memory_space<vmem>>, vector<32x302xbf16>,
    %c0_35 = arith.constant 0 : index
    %c0_36 = arith.constant 0 : index
    %c0_37 = arith.constant 0 : index
    %30 = vector.load %arg3[%c0_35, %c0_36, %c0_37] : memref<1x32x128xbf16, #tpu.memory_space<vmem>>, vector<1x32x82xbf16>
    %31 = vector.shape_cast %30 : vector<1x32x82xbf16> to vector<32x82xbf16>
    %c160_38 = arith.constant 160 : index
    %c302 = arith.constant 302 : index
    %32 = vector.load %arg7[%c160_38, %c302] : memref<256x384xbf16, #tpu.memory_space<vmem>>, vector<32x82xbf16>
    tpu.vector_store %arg7[%c160_38, %c302], %31 {strides = array<i32>} : memref<256x384xbf16, #tpu.memory_space<vmem>>, vector<32x82xbf16>,
    %c0_39 = arith.constant 0 : index
    %c0_40 = arith.constant 0 : index
    %c90 = arith.constant 90 : index
    %33 = vector.load %arg2[%c0_39, %c0_40, %c90] : memref<1x32x384xbf16, #tpu.memory_space<vmem>>, vector<1x32x294xbf16>
    %34 = vector.shape_cast %33 : vector<1x32x294xbf16> to vector<32x294xbf16>
    %c192 = arith.constant 192 : index
    %c0_41 = arith.constant 0 : index
    %35 = vector.load %arg7[%c192, %c0_41] : memref<256x384xbf16, #tpu.memory_space<vmem>>, vector<32x294xbf16>
    tpu.vector_store %arg7[%c192, %c0_41], %34 {strides = array<i32>} : memref<256x384xbf16, #tpu.memory_space<vmem>>, vector<32x294xbf16>,
    %c0_42 = arith.constant 0 : index
    %c0_43 = arith.constant 0 : index
    %c0_44 = arith.constant 0 : index
    %36 = vector.load %arg3[%c0_42, %c0_43, %c0_44] : memref<1x32x128xbf16, #tpu.memory_space<vmem>>, vector<1x32x90xbf16>
    %37 = vector.shape_cast %36 : vector<1x32x90xbf16> to vector<32x90xbf16>
    %c192_45 = arith.constant 192 : index
    %c294 = arith.constant 294 : index
    %38 = vector.load %arg7[%c192_45, %c294] : memref<256x384xbf16, #tpu.memory_space<vmem>>, vector<32x90xbf16>
    tpu.vector_store %arg7[%c192_45, %c294], %37 {strides = array<i32>} : memref<256x384xbf16, #tpu.memory_space<vmem>>, vector<32x90xbf16>,
    %c0_46 = arith.constant 0 : index
    %c0_47 = arith.constant 0 : index
    %c91 = arith.constant 91 : index
    %39 = vector.load %arg2[%c0_46, %c0_47, %c91] : memref<1x32x384xbf16, #tpu.memory_space<vmem>>, vector<1x32x293xbf16>
    %40 = vector.shape_cast %39 : vector<1x32x293xbf16> to vector<32x293xbf16>
    %c224 = arith.constant 224 : index
    %c0_48 = arith.constant 0 : index
    %41 = vector.load %arg7[%c224, %c0_48] : memref<256x384xbf16, #tpu.memory_space<vmem>>, vector<32x293xbf16>
    tpu.vector_store %arg7[%c224, %c0_48], %40 {strides = array<i32>} : memref<256x384xbf16, #tpu.memory_space<vmem>>, vector<32x293xbf16>,
    %c0_49 = arith.constant 0 : index
    %c0_50 = arith.constant 0 : index
    %c0_51 = arith.constant 0 : index
    %42 = vector.load %arg3[%c0_49, %c0_50, %c0_51] : memref<1x32x128xbf16, #tpu.memory_space<vmem>>, vector<1x32x91xbf16>
    %43 = vector.shape_cast %42 : vector<1x32x91xbf16> to vector<32x91xbf16>
    %c224_52 = arith.constant 224 : index
    %c293 = arith.constant 293 : index
    %44 = vector.load %arg7[%c224_52, %c293] : memref<256x384xbf16, #tpu.memory_space<vmem>>, vector<32x91xbf16>
    tpu.vector_store %arg7[%c224_52, %c293], %43 {strides = array<i32>} : memref<256x384xbf16, #tpu.memory_space<vmem>>, vector<32x91xbf16>,
    %c0_53 = arith.constant 0 : index
    %c0_54 = arith.constant 0 : index
    %45 = vector.load %arg4[%c0_53, %c0_54] : memref<8x256xbf16, #tpu.memory_space<vmem>>, vector<8x256xbf16>
    %c0_55 = arith.constant 0 : index
    %c0_56 = arith.constant 0 : index
    %46 = vector.load %arg7[%c0_55, %c0_56] : memref<256x384xbf16, #tpu.memory_space<vmem>>, vector<256x384xbf16>
    %cst = arith.constant dense<0.000000e+00> : vector<8x384xf32>
    %47 = tpu.matmul %45, %46, %cst {dimension_numbers = #tpu.dot_dimension_numbers<[1], [0], [0], [1], [0, 0, 1, 1], [], []>} : vector<8x256xbf16>, vector<256x384xbf16>, vector<8x384xf32> -> vector<8x384xf32>
    %c0_57 = arith.constant 0 : index
    %c0_58 = arith.constant 0 : index
    %48 = vector.load %arg5[%c0_57, %c0_58] : memref<8x1xf32, #tpu.memory_space<vmem>>, vector<8x1xf32>
    %49 = vector.broadcast %48 : vector<8x1xf32> to vector<8x384xf32>
    %50 = arith.addf %47, %49 : vector<8x384xf32>
    %cst_59 = arith.constant 0.000000e+00 : f32
    %51 = vector.broadcast %cst_59 : f32 to vector<8x384xf32>
    %52 = arith.maximumf %50, %51 : vector<8x384xf32>
    %53 = arith.truncf %52 : vector<8x384xf32> to vector<8x384xbf16>
    %c0_60 = arith.constant 0 : index
    %c0_61 = arith.constant 0 : index
    %c0_62 = arith.constant 0 : index
    %54 = vector.load %arg6[%c0_60, %c0_61, %c0_62] : memref<1x8x384xbf16, #tpu.memory_space<vmem>>, vector<1x8x384xbf16>
    %55 = vector.shape_cast %54 : vector<1x8x384xbf16> to vector<8x384xbf16>
    %56 = vector.shape_cast %53 : vector<8x384xbf16> to vector<1x8x384xbf16>
    tpu.vector_store %arg6[%c0_60, %c0_61, %c0_62], %56 {strides = array<i32>} : memref<1x8x384xbf16, #tpu.memory_space<vmem>>, vector<1x8x384xbf16>,
    return
  }
  func.func @transform_0(%arg0: i32, %arg1: i32) -> (i32, i32, i32) {
    %c0_i32 = arith.constant 0 : i32
    %c0_i32_0 = arith.constant 0 : i32
    return %arg0, %c0_i32, %arg1 : i32, i32, i32
  }
  func.func @transform_1(%arg0: i32, %arg1: i32) -> (i32, i32, i32) {
    %c1_i32 = arith.constant 1 : i32
    %0 = arith.addi %arg1, %c1_i32 : i32
    %c3_i32 = arith.constant 3 : i32
    %1 = arith.muli %0, %c3_i32 : i32
    %c0_i32 = arith.constant 0 : i32
    %c0_i32_0 = arith.constant 0 : i32
    return %arg0, %c0_i32, %1 : i32, i32, i32
  }
  func.func @transform_2(%arg0: i32, %arg1: i32) -> (i32, i32) {
    %c0_i32 = arith.constant 0 : i32
    %c0_i32_0 = arith.constant 0 : i32
    %c0_i32_1 = arith.constant 0 : i32
    return %c0_i32, %c0_i32_0 : i32, i32
  }
  func.func @transform_3(%arg0: i32, %arg1: i32) -> (i32, i32) {
    %c0_i32 = arith.constant 0 : i32
    %c0_i32_0 = arith.constant 0 : i32
    %c0_i32_1 = arith.constant 0 : i32
    return %c0_i32, %c0_i32_0 : i32, i32
  }
  func.func @transform_4(%arg0: i32, %arg1: i32) -> (i32, i32, i32) {
    %c0_i32 = arith.constant 0 : i32
    %c0_i32_0 = arith.constant 0 : i32
    return %arg0, %c0_i32, %arg1 : i32, i32, i32
  }
}

</mosaic_0001>

<llo_original>
// kernel: basic_block_forward.1
$region0: #{basic_block_forward.1}
  #allocation0 [shape = 'u32[]', space=smem, size = 0x4, offset = 0x4, fixed_abs, tag = 'smem constant byte address 0x4 - core index']
  #allocation1 [shape = 'u32[72,128]{1,0:T(1,128)}', space=vmem, size = 0x9000, scoped, tag = 'internal scratch']
  #allocation2 [shape = 'bf16[256,384]{1,0:T(8,128)(2,1)}', space=vmem, size = 0x30000, scoped, tag = 'scratch operand']
  %s0 = inlined_call_operand.vmem [shape: bf16[2,32,896], index: 0, kind: input, shape index: {}, may-alias: {0,1}]
  %s1 = inlined_call_operand.vmem [shape: bf16[2,32,896], index: 1, kind: input, shape index: {}, may-alias: {0,1}]
  %s2 = inlined_call_operand.vmem [shape: bf16[8,256], index: 2, kind: input, shape index: {}]
  %s3 = inlined_call_operand.vmem [shape: f32[8,1], index: 3, kind: input, shape index: {}]
  %s4 = inlined_call_operand.vmem [shape: bf16[2,8,768], index: 4, kind: output, shape index: {}]
  %s5 = sld [smem:[#allocation0]]
  $region156: #{basic_block_forward.1} parent=0
    _
  %s7 = ssub.s32 1, %s5
  %s8 = scalar_select 0, %s7, %s5
  $region1: #{basic_block_forward.1} parent=0
    #allocation3 [shape = 'u8[49152]{0}', space=vmem, size = 0xc000, scoped, tag = 'input window, operand 0']
    #allocation4 [shape = 'u8[16384]{0}', space=vmem, size = 0x4000, scoped, tag = 'input window, operand 1']
    loop: start=0, step=1, limit=6
    $region2: #{basic_block_forward.1} parent=1 // loop_pre_header
      _
    $region3: #{basic_block_forward.1} parent=1 // loop_header
      %s10 = sphi 0, %s14
      %p11 = scmp.ge.s32.totalorder %s10, 6
      %s17 = sphi 0, %s29
      %s18 = sphi 0, %s25
      %s19 = sphi 0, %s17
      %s20 = sphi 0, %s18
      %s21 = sphi 0, %s19
      %s22 = sphi 0, %s20
      %s34 = sphi 0, %s36
      %s37 = sphi 0, %s34
      %s38 = sphi 0, %s37
      %s54 = sphi 0, %s38
      %s66 = sphi 0, %s68
      %s69 = sphi 0, %s66
      %s70 = sphi 0, %s69
      %s86 = sphi 0, %s70
      %s90 = sphi 0, %s90
      %s92 = sphi 0, %s90
      %s93 = sphi 0, %s92
      %s107 = sphi 0, %s93
      %s111 = sphi 0, %s111
      %s113 = sphi 0, %s111
      %s114 = sphi 0, %s113
      %s128 = sphi 0, %s114
      %s136 = sphi 0, %s138
      %s139 = sphi 0, %s136
      %s140 = sphi 0, %s139
      %s156 = sphi 0, %s140
    $region4: #{basic_block_forward.1} parent=1 // loop_header_branch
      %13 = sbr.rel (%p11) target = $region8
    $region5: #{basic_block_forward.1} parent=1 // loop_body
      %s15 = ssub.s32 %s10, 1
      %s16 = ssub.s32 %s10, 2
      %s23 = sadd.s32 1, %s18
      %p24 = scmp.ge.s32.totalorder %s23, 2
      %s25 = scalar_select %p24, 0, %s23
      %s26 = sadd.s32 1, %s17
      %s27 = scalar_select %p24, %s26, %s17
      %p28 = scmp.ge.s32.totalorder %s27, 2
      %s29 = scalar_select %p28, 0, %s27
      %s30 = ssub.s32 %s17, %s29
      %s31 = ssub.s32 %s18, %s25
      %s32 = sor.u32 %s30, %s31
      %p33 = scmp.eq.s32.totalorder %s32, 0
      %s35 = sadd.s32 %s34, 1
      %s36 = scalar_select %p33, %s34, %s35
      %p39 = pneg %p33
      %p40 = scmp.eq.s32.totalorder %s10, 3
      %p41 = por %p39, %p40
      %p42 = scmp.ne.s32.totalorder %s34, %s37
      %p43 = scmp.eq.s32.totalorder %s10, 0
      %p44 = por %p42, %p43
      %p45 = scmp.ne.s32.totalorder %s34, %s37
      %p46 = scmp.eq.s32.totalorder %s15, 3
      %p47 = por %p45, %p46
      %p48 = scmp.ne.s32.totalorder %s37, %s38
      %p49 = scmp.eq.s32.totalorder %s15, 0
      %p50 = por %p48, %p49
      %p51 = scmp.ne.s32.totalorder %s37, %s38
      %p52 = scmp.eq.s32.totalorder %s16, 3
      %p53 = por %p51, %p52
      %p55 = scmp.ne.s32.totalorder %s38, %s54
      %p56 = scmp.eq.s32.totalorder %s16, 0
      %p57 = por %p55, %p56
      %s58 = sadd.s32 %s18, 1
      %s59 = smul.u32 %s58, 3
      %s60 = sadd.s32 %s25, 1
      %s61 = smul.u32 %s60, 3
      %s62 = ssub.s32 %s17, %s29
      %s63 = ssub.s32 %s59, %s61
      %s64 = sor.u32 %s62, %s63
      %p65 = scmp.eq.s32.totalorder %s64, 0
      %s67 = sadd.s32 %s66, 1
      %s68 = scalar_select %p65, %s66, %s67
      %p71 = pneg %p65
      %p72 = scmp.eq.s32.totalorder %s10, 3
      %p73 = por %p71, %p72
      %p74 = scmp.ne.s32.totalorder %s66, %s69
      %p75 = scmp.eq.s32.totalorder %s10, 0
      %p76 = por %p74, %p75
      %p77 = scmp.ne.s32.totalorder %s66, %s69
      %p78 = scmp.eq.s32.totalorder %s15, 3
      %p79 = por %p77, %p78
      %p80 = scmp.ne.s32.totalorder %s69, %s70
      %p81 = scmp.eq.s32.totalorder %s15, 0
      %p82 = por %p80, %p81
      %p83 = scmp.ne.s32.totalorder %s69, %s70
      %p84 = scmp.eq.s32.totalorder %s16, 3
      %p85 = por %p83, %p84
      %p87 = scmp.ne.s32.totalorder %s70, %s86
      %p88 = scmp.eq.s32.totalorder %s16, 0
      %p89 = por %p87, %p88
      %s91 = sadd.s32 %s90, 1
      %p94 = scmp.eq.s32.totalorder %s10, 3
      %p95 = scmp.ne.s32.totalorder %s90, %s92
      %p96 = scmp.eq.s32.totalorder %s10, 0
      %p97 = por %p95, %p96
      %p98 = scmp.ne.s32.totalorder %s90, %s92
      %p99 = scmp.eq.s32.totalorder %s15, 3
      %p100 = por %p98, %p99
      %p101 = scmp.ne.s32.totalorder %s92, %s93
      %p102 = scmp.eq.s32.totalorder %s15, 0
      %p103 = por %p101, %p102
      %p104 = scmp.ne.s32.totalorder %s92, %s93
      %p105 = scmp.eq.s32.totalorder %s16, 3
      %p106 = por %p104, %p105
      %p108 = scmp.ne.s32.totalorder %s93, %s107
      %p109 = scmp.eq.s32.totalorder %s16, 0
      %p110 = por %p108, %p109
      %s112 = sadd.s32 %s111, 1
      %p115 = scmp.eq.s32.totalorder %s10, 3
      %p116 = scmp.ne.s32.totalorder %s111, %s113
      %p117 = scmp.eq.s32.totalorder %s10, 0
      %p118 = por %p116, %p117
      %p119 = scmp.ne.s32.totalorder %s111, %s113
      %p120 = scmp.eq.s32.totalorder %s15, 3
      %p121 = por %p119, %p120
      %p122 = scmp.ne.s32.totalorder %s113, %s114
      %p123 = scmp.eq.s32.totalorder %s15, 0
      %p124 = por %p122, %p123
      %p125 = scmp.ne.s32.totalorder %s113, %s114
      %p126 = scmp.eq.s32.totalorder %s16, 3
      %p127 = por %p125, %p126
      %p129 = scmp.ne.s32.totalorder %s114, %s128
      %p130 = scmp.eq.s32.totalorder %s16, 0
      %p131 = por %p129, %p130
      %s132 = ssub.s32 %s17, %s29
      %s133 = ssub.s32 %s18, %s25
      %s134 = sor.u32 %s132, %s133
      %p135 = scmp.eq.s32.totalorder %s134, 0
      %s137 = sadd.s32 %s136, 1
      %s138 = scalar_select %p135, %s136, %s137
      %p141 = pneg %p135
      %p142 = scmp.eq.s32.totalorder %s10, 3
      %p143 = por %p141, %p142
      %p144 = scmp.ne.s32.totalorder %s136, %s139
      %p145 = scmp.eq.s32.totalorder %s10, 0
      %p146 = por %p144, %p145
      %p147 = scmp.ne.s32.totalorder %s136, %s139
      %p148 = scmp.eq.s32.totalorder %s15, 3
      %p149 = por %p147, %p148
      %p150 = scmp.ne.s32.totalorder %s139, %s140
      %p151 = scmp.eq.s32.totalorder %s15, 0
      %p152 = por %p150, %p151
      %p153 = scmp.ne.s32.totalorder %s139, %s140
      %p154 = scmp.eq.s32.totalorder %s16, 3
      %p155 = por %p153, %p154
      %p157 = scmp.ne.s32.totalorder %s140, %s156
      %p158 = scmp.eq.s32.totalorder %s16, 0
      %p159 = por %p157, %p158
      %p160 = scmp.le.s32.totalorder 1, %s10
      %p161 = scmp.lt.s32.totalorder %s10, 5
      %p162 = pnand %p160, %p161
      %p163 = pneg %p162
      // Predicated region
      $region9: #{basic_block_forward.1} parent=5 // pred_check
        _
      $region10: #{basic_block_forward.1} parent=5 // pred_check_branch
        %165 = sbr.rel (%p162) target = $region12
      $region11: #{basic_block_forward.1} parent=5 // pred_region
        %s166 = ssub.s32 %s10, 1
        // Predicated region
        $region13: #{basic_block_forward.1} parent=11 // pred_check
          %p167 = pneg %p103
        $region14: #{basic_block_forward.1} parent=11 // pred_check_branch
          %169 = sbr.rel (%p167) target = $region16
        $region15: #{basic_block_forward.1} parent=11 // pred_region
          _
        $region16: #{basic_block_forward.1} parent=11 // pred_fallthru
          _
        // Predicated region
        $region17: #{basic_block_forward.1} parent=11 // pred_check
          %p170 = pneg %p124
        $region18: #{basic_block_forward.1} parent=11 // pred_check_branch
          %172 = sbr.rel (%p170) target = $region20
        $region19: #{basic_block_forward.1} parent=11 // pred_region
          _
        $region20: #{basic_block_forward.1} parent=11 // pred_fallthru
          _
      $region12: #{basic_block_forward.1} parent=5 // pred_fallthru
        _
      %p173 = scmp.lt.s32.totalorder %s10, 4
      // Predicated region
      $region21: #{basic_block_forward.1} parent=5 // pred_check
        %p174 = pneg %p173
      $region22: #{basic_block_forward.1} parent=5 // pred_check_branch
        %176 = sbr.rel (%p174) target = $region24
      $region23: #{basic_block_forward.1} parent=5 // pred_region
        // Predicated region
        $region25: #{basic_block_forward.1} parent=23 // pred_check
          %p177 = pneg %p44
        $region26: #{basic_block_forward.1} parent=23 // pred_check_branch
          %179 = sbr.rel (%p177) target = $region28
        $region27: #{basic_block_forward.1} parent=23 // pred_region
          %s180 = sand.u32 %s34, 1
          %s181 = sand.u32 %s34, 1
          %s182 = smul.addr %s181, 48
          %s183 = scalar_lea.vmem [#allocation3], %s182
          %s184 = smul.u32 3, %s18
          %s185 = ssub.s32 7, %s184
          %p186 = scmp.lt.s32.totalorder %s185, 3
          %s187 = scalar_select %p186, %s185, 3
          %s188 = smul.u32 16, %s187
          %p189 = scmp.ne.s32.totalorder 0, %s188
          %s190 = smul.addr %s17, 28
          %s191 = sadd.s32 %s184, %s190
          %s192 = smul.addr %s191, 4
          %s193 = scalar_lea.vmem %s0, %s192
          %s194 = smul.u32 %s187, 4
          // Predicated region
          $region29: #{basic_block_forward.1} parent=27 // pred_check
            %p195 = pneg %p189
          $region30: #{basic_block_forward.1} parent=27 // pred_check_branch
            %197 = sbr.rel (%p195) target = $region32
          $region31: #{basic_block_forward.1} parent=27 // pred_region
            %p198 = scmp.lt.u32.totalorder %s194, 8
            %p199 = pneg %p198
            // Predicated region
            $region33: #{basic_block_forward.1} parent=31 // pred_check
              _
            $region34: #{basic_block_forward.1} parent=31 // pred_check_branch
              %201 = sbr.rel (%p198) target = $region36
            $region35: #{basic_block_forward.1} parent=31 // pred_region
              %s223 = sand.u32 %s194, 7
              %p224 = scmp.eq.s32.totalorder %s223, 0
              // Predicated region
              $region48: #{basic_block_forward.1} parent=35 // pred_check
                %p225 = pneg %p224
              $region49: #{basic_block_forward.1} parent=35 // pred_check_branch
                %227 = sbr.rel (%p225) target = $region51
              $region50: #{basic_block_forward.1} parent=35 // pred_region
                %s228 = sshrl.u32 %s194, 3
                %s229 = sshrl.u32 %s228, 3
                // While loop
                $region52: #{basic_block_forward.1} parent=50 // loop_pre_header
                  _
                $region53: #{basic_block_forward.1} parent=50 // loop_header
                  %s231 = sphi 0, %s233
                  %p232 = scmp.ge.s32.totalorder %s231, %s229
                  %s236 = sphi 0, %s305
                  %s237 = sphi %s193, %s308
                  %s238 = sphi %s183, %s309
                $region54: #{basic_block_forward.1} parent=50 // loop_header_branch
                  %235 = sbr.rel (%p232) target = $region58
                $region55: #{basic_block_forward.1} parent=50 // loop_body
                  %v239 = vld [vmem:[%s237] sm:$0xff]
                  %240 = vst [vmem:[%s238] sm:$0xff] %v239
                  %v241 = vld [vmem:[%s237 + $0x8] sm:$0xff]
                  %242 = vst [vmem:[%s238 + $0x8] sm:$0xff] %v241
                  %v243 = vld [vmem:[%s237 + $0x10] sm:$0xff]
                  %244 = vst [vmem:[%s238 + $0x10] sm:$0xff] %v243
                  %v245 = vld [vmem:[%s237 + $0x18] sm:$0xff]
                  %246 = vst [vmem:[%s238 + $0x18] sm:$0xff] %v245
                  %v247 = vld [vmem:[%s237 + $0x20] sm:$0xff]
                  %248 = vst [vmem:[%s238 + $0x20] sm:$0xff] %v247
                  %v249 = vld [vmem:[%s237 + $0x28] sm:$0xff]
                  %250 = vst [vmem:[%s238 + $0x28] sm:$0xff] %v249
                  %v251 = vld [vmem:[%s237 + $0x30] sm:$0xff]
                  %252 = vst [vmem:[%s238 + $0x30] sm:$0xff] %v251
                  %v253 = vld [vmem:[%s237 + $0x38] sm:$0xff]
                  %254 = vst [vmem:[%s238 + $0x38] sm:$0xff] %v253
                  %v255 = vld [vmem:[%s237 + $0x1c] sm:$0xff]
                  %256 = vst [vmem:[%s238 + $0xc] sm:$0xff] %v255
                  %v257 = vld [vmem:[%s237 + $0x24] sm:$0xff]
                  %258 = vst [vmem:[%s238 + $0x14] sm:$0xff] %v257
                  %v259 = vld [vmem:[%s237 + $0x2c] sm:$0xff]
                  %260 = vst [vmem:[%s238 + $0x1c] sm:$0xff] %v259
                  %v261 = vld [vmem:[%s237 + $0x34] sm:$0xff]
                  %262 = vst [vmem:[%s238 + $0x24] sm:$0xff] %v261
                  %v263 = vld [vmem:[%s237 + $0x3c] sm:$0xff]
                  %264 = vst [vmem:[%s238 + $0x2c] sm:$0xff] %v263
                  %v265 = vld [vmem:[%s237 + $0x44] sm:$0xff]
                  %266 = vst [vmem:[%s238 + $0x34] sm:$0xff] %v265
                  %v267 = vld [vmem:[%s237 + $0x4c] sm:$0xff]
                  %268 = vst [vmem:[%s238 + $0x3c] sm:$0xff] %v267
                  %v269 = vld [vmem:[%s237 + $0x54] sm:$0xff]
                  %270 = vst [vmem:[%s238 + $0x44] sm:$0xff] %v269
                  %v271 = vld [vmem:[%s237 + $0x38] sm:$0xff]
                  %272 = vst [vmem:[%s238 + $0x18] sm:$0xff] %v271
                  %v273 = vld [vmem:[%s237 + $0x40] sm:$0xff]
                  %274 = vst [vmem:[%s238 + $0x20] sm:$0xff] %v273
                  %v275 = vld [vmem:[%s237 + $0x48] sm:$0xff]
                  %276 = vst [vmem:[%s238 + $0x28] sm:$0xff] %v275
                  %v277 = vld [vmem:[%s237 + $0x50] sm:$0xff]
                  %278 = vst [vmem:[%s238 + $0x30] sm:$0xff] %v277
                  %v279 = vld [vmem:[%s237 + $0x58] sm:$0xff]
                  %280 = vst [vmem:[%s238 + $0x38] sm:$0xff] %v279
                  %v281 = vld [vmem:[%s237 + $0x60] sm:$0xff]
                  %282 = vst [vmem:[%s238 + $0x40] sm:$0xff] %v281
                  %v283 = vld [vmem:[%s237 + $0x68] sm:$0xff]
                  %284 = vst [vmem:[%s238 + $0x48] sm:$0xff] %v283
                  %v285 = vld [vmem:[%s237 + $0x70] sm:$0xff]
                  %286 = vst [vmem:[%s238 + $0x50] sm:$0xff] %v285
                  %v287 = vld [vmem:[%s237 + $0x54] sm:$0xff]
                  %288 = vst [vmem:[%s238 + $0x24] sm:$0xff] %v287
                  %v289 = vld [vmem:[%s237 + $0x5c] sm:$0xff]
                  %290 = vst [vmem:[%s238 + $0x2c] sm:$0xff] %v289
                  %v291 = vld [vmem:[%s237 + $0x64] sm:$0xff]
                  %292 = vst [vmem:[%s238 + $0x34] sm:$0xff] %v291
                  %v293 = vld [vmem:[%s237 + $0x6c] sm:$0xff]
                  %294 = vst [vmem:[%s238 + $0x3c] sm:$0xff] %v293
                  %v295 = vld [vmem:[%s237 + $0x74] sm:$0xff]
                  %296 = vst [vmem:[%s238 + $0x44] sm:$0xff] %v295
                  %v297 = vld [vmem:[%s237 + $0x7c] sm:$0xff]
                  %298 = vst [vmem:[%s238 + $0x4c] sm:$0xff] %v297
                  %v299 = vld [vmem:[%s237 + $0x84] sm:$0xff]
                  %300 = vst [vmem:[%s238 + $0x54] sm:$0xff] %v299
                  %v301 = vld [vmem:[%s237 + $0x8c] sm:$0xff]
                  %302 = vst [vmem:[%s238 + $0x5c] sm:$0xff] %v301
                  %s303 = sadd.s32 1, %s236
                  %p304 = scmp.ge.s32.totalorder %s303, %s229
                  %s305 = scalar_select %p304, 0, %s303
                  %s306 = smul.u32 %s305, 64
                  %s307 = smul.u32 %s305, 64
                  %s308 = scalar_lea.vmem %s193, %s306
                  %s309 = scalar_lea.vmem %s183, %s307 [#allocation3]
                $region56: #{basic_block_forward.1} parent=50 // loop_footer
                  %s233 = sadd.s32 %s231, 1
                $region57: #{basic_block_forward.1} parent=50 // loop_footer_branch
                  %230 = sbr.rel target = $region53
                $region58: #{basic_block_forward.1} parent=50 // loop_exit
                  _
                %s310 = sshrl.u32 %s228, 3
                %s311 = sand.u32 %s228, 7
                %s312 = smul.u32 %s310, 8
                %s313 = smul.u32 8, %s312
                %s314 = scalar_lea.vmem %s193, %s313
                %s315 = smul.u32 8, %s312
                %s316 = scalar_lea.vmem %s183, %s315 [#allocation3]
                // While loop
                $region59: #{basic_block_forward.1} parent=50 // loop_pre_header
                  _
                $region60: #{basic_block_forward.1} parent=50 // loop_header
                  %s318 = sphi 0, %s320
                  %p319 = scmp.ge.s32.totalorder %s318, %s311
                  %s323 = sphi 0, %s336
                  %s324 = sphi %s314, %s339
                  %s325 = sphi %s316, %s340
                $region61: #{basic_block_forward.1} parent=50 // loop_header_branch
                  %322 = sbr.rel (%p319) target = $region65
                $region62: #{basic_block_forward.1} parent=50 // loop_body
                  %v326 = vld [vmem:[%s324] sm:$0xff]
                  %327 = vst [vmem:[%s325] sm:$0xff] %v326
                  %v328 = vld [vmem:[%s324 + $0x1c] sm:$0xff]
                  %329 = vst [vmem:[%s325 + $0xc] sm:$0xff] %v328
                  %v330 = vld [vmem:[%s324 + $0x38] sm:$0xff]
                  %331 = vst [vmem:[%s325 + $0x18] sm:$0xff] %v330
                  %v332 = vld [vmem:[%s324 + $0x54] sm:$0xff]
                  %333 = vst [vmem:[%s325 + $0x24] sm:$0xff] %v332
                  %s334 = sadd.s32 1, %s323
                  %p335 = scmp.ge.s32.totalorder %s334, %s311
                  %s336 = scalar_select %p335, 0, %s334
                  %s337 = smul.u32 %s336, 8
                  %s338 = smul.u32 %s336, 8
                  %s339 = scalar_lea.vmem %s314, %s337
                  %s340 = scalar_lea.vmem %s316, %s338 [#allocation3]
                $region63: #{basic_block_forward.1} parent=50 // loop_footer
                  %s320 = sadd.s32 %s318, 1
                $region64: #{basic_block_forward.1} parent=50 // loop_footer_branch
                  %317 = sbr.rel target = $region60
                $region65: #{basic_block_forward.1} parent=50 // loop_exit
                  _
              $region51: #{basic_block_forward.1} parent=35 // pred_fallthru
                _
              %p341 = pneg %p224
              // Predicated region
              $region66: #{basic_block_forward.1} parent=35 // pred_check
                _
              $region67: #{basic_block_forward.1} parent=35 // pred_check_branch
                %343 = sbr.rel (%p224) target = $region69
              $region68: #{basic_block_forward.1} parent=35 // pred_region
                %s344 = sand.u32 %s194, 7
                %s345 = ssub.s32 %s194, %s344
                %s346 = scalar_lea.vmem %s193, %s345
                %s347 = ssub.s32 %s194, %s344
                %s348 = scalar_lea.vmem %s183, %s347 [#allocation3]
                %s349 = sshrl.u32 %s194, 3
                %s350 = sshrl.u32 %s349, 3
                // While loop
                $region70: #{basic_block_forward.1} parent=68 // loop_pre_header
                  _
                $region71: #{basic_block_forward.1} parent=68 // loop_header
                  %s352 = sphi 0, %s354
                  %p353 = scmp.ge.s32.totalorder %s352, %s350
                  %s357 = sphi 0, %s426
                  %s358 = sphi %s193, %s429
                  %s359 = sphi %s183, %s430
                $region72: #{basic_block_forward.1} parent=68 // loop_header_branch
                  %356 = sbr.rel (%p353) target = $region76
                $region73: #{basic_block_forward.1} parent=68 // loop_body
                  %v360 = vld [vmem:[%s358] sm:$0xff]
                  %361 = vst [vmem:[%s359] sm:$0xff] %v360
                  %v362 = vld [vmem:[%s358 + $0x8] sm:$0xff]
                  %363 = vst [vmem:[%s359 + $0x8] sm:$0xff] %v362
                  %v364 = vld [vmem:[%s358 + $0x10] sm:$0xff]
                  %365 = vst [vmem:[%s359 + $0x10] sm:$0xff] %v364
                  %v366 = vld [vmem:[%s358 + $0x18] sm:$0xff]
                  %367 = vst [vmem:[%s359 + $0x18] sm:$0xff] %v366
                  %v368 = vld [vmem:[%s358 + $0x20] sm:$0xff]
                  %369 = vst [vmem:[%s359 + $0x20] sm:$0xff] %v368
                  %v370 = vld [vmem:[%s358 + $0x28] sm:$0xff]
                  %371 = vst [vmem:[%s359 + $0x28] sm:$0xff] %v370
                  %v372 = vld [vmem:[%s358 + $0x30] sm:$0xff]
                  %373 = vst [vmem:[%s359 + $0x30] sm:$0xff] %v372
                  %v374 = vld [vmem:[%s358 + $0x38] sm:$0xff]
                  %375 = vst [vmem:[%s359 + $0x38] sm:$0xff] %v374
                  %v376 = vld [vmem:[%s358 + $0x1c] sm:$0xff]
                  %377 = vst [vmem:[%s359 + $0xc] sm:$0xff] %v376
                  %v378 = vld [vmem:[%s358 + $0x24] sm:$0xff]
                  %379 = vst [vmem:[%s359 + $0x14] sm:$0xff] %v378
                  %v380 = vld [vmem:[%s358 + $0x2c] sm:$0xff]
                  %381 = vst [vmem:[%s359 + $0x1c] sm:$0xff] %v380
                  %v382 = vld [vmem:[%s358 + $0x34] sm:$0xff]
                  %383 = vst [vmem:[%s359 + $0x24] sm:$0xff] %v382
                  %v384 = vld [vmem:[%s358 + $0x3c] sm:$0xff]
                  %385 = vst [vmem:[%s359 + $0x2c] sm:$0xff] %v384
                  %v386 = vld [vmem:[%s358 + $0x44] sm:$0xff]
                  %387 = vst [vmem:[%s359 + $0x34] sm:$0xff] %v386
                  %v388 = vld [vmem:[%s358 + $0x4c] sm:$0xff]
                  %389 = vst [vmem:[%s359 + $0x3c] sm:$0xff] %v388
                  %v390 = vld [vmem:[%s358 + $0x54] sm:$0xff]
                  %391 = vst [vmem:[%s359 + $0x44] sm:$0xff] %v390
                  %v392 = vld [vmem:[%s358 + $0x38] sm:$0xff]
                  %393 = vst [vmem:[%s359 + $0x18] sm:$0xff] %v392
                  %v394 = vld [vmem:[%s358 + $0x40] sm:$0xff]
                  %395 = vst [vmem:[%s359 + $0x20] sm:$0xff] %v394
                  %v396 = vld [vmem:[%s358 + $0x48] sm:$0xff]
                  %397 = vst [vmem:[%s359 + $0x28] sm:$0xff] %v396
                  %v398 = vld [vmem:[%s358 + $0x50] sm:$0xff]
                  %399 = vst [vmem:[%s359 + $0x30] sm:$0xff] %v398
                  %v400 = vld [vmem:[%s358 + $0x58] sm:$0xff]
                  %401 = vst [vmem:[%s359 + $0x38] sm:$0xff] %v400
                  %v402 = vld [vmem:[%s358 + $0x60] sm:$0xff]
                  %403 = vst [vmem:[%s359 + $0x40] sm:$0xff] %v402
                  %v404 = vld [vmem:[%s358 + $0x68] sm:$0xff]
                  %405 = vst [vmem:[%s359 + $0x48] sm:$0xff] %v404
                  %v406 = vld [vmem:[%s358 + $0x70] sm:$0xff]
                  %407 = vst [vmem:[%s359 + $0x50] sm:$0xff] %v406
                  %v408 = vld [vmem:[%s358 + $0x54] sm:$0xff]
                  %409 = vst [vmem:[%s359 + $0x24] sm:$0xff] %v408
                  %v410 = vld [vmem:[%s358 + $0x5c] sm:$0xff]
                  %411 = vst [vmem:[%s359 + $0x2c] sm:$0xff] %v410
                  %v412 = vld [vmem:[%s358 + $0x64] sm:$0xff]
                  %413 = vst [vmem:[%s359 + $0x34] sm:$0xff] %v412
                  %v414 = vld [vmem:[%s358 + $0x6c] sm:$0xff]
                  %415 = vst [vmem:[%s359 + $0x3c] sm:$0xff] %v414
                  %v416 = vld [vmem:[%s358 + $0x74] sm:$0xff]
                  %417 = vst [vmem:[%s359 + $0x44] sm:$0xff] %v416
                  %v418 = vld [vmem:[%s358 + $0x7c] sm:$0xff]
                  %419 = vst [vmem:[%s359 + $0x4c] sm:$0xff] %v418
                  %v420 = vld [vmem:[%s358 + $0x84] sm:$0xff]
                  %421 = vst [vmem:[%s359 + $0x54] sm:$0xff] %v420
                  %v422 = vld [vmem:[%s358 + $0x8c] sm:$0xff]
                  %423 = vst [vmem:[%s359 + $0x5c] sm:$0xff] %v422
                  %s424 = sadd.s32 1, %s357
                  %p425 = scmp.ge.s32.totalorder %s424, %s350
                  %s426 = scalar_select %p425, 0, %s424
                  %s427 = smul.u32 %s426, 64
                  %s428 = smul.u32 %s426, 64
                  %s429 = scalar_lea.vmem %s193, %s427
                  %s430 = scalar_lea.vmem %s183, %s428 [#allocation3]
                $region74: #{basic_block_forward.1} parent=68 // loop_footer
                  %s354 = sadd.s32 %s352, 1
                $region75: #{basic_block_forward.1} parent=68 // loop_footer_branch
                  %351 = sbr.rel target = $region71
                $region76: #{basic_block_forward.1} parent=68 // loop_exit
                  _
                %s431 = sshrl.u32 %s349, 3
                %s432 = sand.u32 %s349, 7
                %s433 = smul.u32 %s431, 8
                %s434 = smul.u32 8, %s433
                %s435 = scalar_lea.vmem %s193, %s434
                %s436 = smul.u32 8, %s433
                %s437 = scalar_lea.vmem %s183, %s436 [#allocation3]
                // While loop
                $region77: #{basic_block_forward.1} parent=68 // loop_pre_header
                  _
                $region78: #{basic_block_forward.1} parent=68 // loop_header
                  %s439 = sphi 0, %s441
                  %p440 = scmp.ge.s32.totalorder %s439, %s432
                  %s444 = sphi 0, %s457
                  %s445 = sphi %s435, %s460
                  %s446 = sphi %s437, %s461
                $region79: #{basic_block_forward.1} parent=68 // loop_header_branch
                  %443 = sbr.rel (%p440) target = $region83
                $region80: #{basic_block_forward.1} parent=68 // loop_body
                  %v447 = vld [vmem:[%s445] sm:$0xff]
                  %448 = vst [vmem:[%s446] sm:$0xff] %v447
                  %v449 = vld [vmem:[%s445 + $0x1c] sm:$0xff]
                  %450 = vst [vmem:[%s446 + $0xc] sm:$0xff] %v449
                  %v451 = vld [vmem:[%s445 + $0x38] sm:$0xff]
                  %452 = vst [vmem:[%s446 + $0x18] sm:$0xff] %v451
                  %v453 = vld [vmem:[%s445 + $0x54] sm:$0xff]
                  %454 = vst [vmem:[%s446 + $0x24] sm:$0xff] %v453
                  %s455 = sadd.s32 1, %s444
                  %p456 = scmp.ge.s32.totalorder %s455, %s432
                  %s457 = scalar_select %p456, 0, %s455
                  %s458 = smul.u32 %s457, 8
                  %s459 = smul.u32 %s457, 8
                  %s460 = scalar_lea.vmem %s435, %s458
                  %s461 = scalar_lea.vmem %s437, %s459 [#allocation3]
                $region81: #{basic_block_forward.1} parent=68 // loop_footer
                  %s441 = sadd.s32 %s439, 1
                $region82: #{basic_block_forward.1} parent=68 // loop_footer_branch
                  %438 = sbr.rel target = $region78
                $region83: #{basic_block_forward.1} parent=68 // loop_exit
                  _
                %s462 = sshll.u32 1, %s344
                %s463 = ssub.s32 %s462, 1
                loop: start=0, step=1, limit=1
                $region84: #{basic_block_forward.1} parent=68 // loop_pre_header
                  _
                $region85: #{basic_block_forward.1} parent=68 // loop_header
                  %s465 = sphi 0, %s469
                  %p466 = scmp.ge.s32.totalorder %s465, 1
                  %s470 = sphi %s346, %s346
                  %s471 = sphi %s348, %s348
                $region86: #{basic_block_forward.1} parent=68 // loop_header_branch
                  %468 = sbr.rel (%p466) target = $region90
                $region87: #{basic_block_forward.1} parent=68 // loop_body
                  %v472 = vld [vmem:[%s470] sm:%s463]
                  %473 = vst [vmem:[%s471] sm:%s463] %v472
                  %v474 = vld [vmem:[%s470 + $0x1c] sm:%s463]
                  %475 = vst [vmem:[%s471 + $0xc] sm:%s463] %v474
                  %v476 = vld [vmem:[%s470 + $0x38] sm:%s463]
                  %477 = vst [vmem:[%s471 + $0x18] sm:%s463] %v476
                  %v478 = vld [vmem:[%s470 + $0x54] sm:%s463]
                  %479 = vst [vmem:[%s471 + $0x24] sm:%s463] %v478
                $region88: #{basic_block_forward.1} parent=68 // loop_footer
                  %s469 = sadd.s32 1, %s465
                $region89: #{basic_block_forward.1} parent=68 // loop_footer_branch
                  %464 = sbr.rel target = $region85
                $region90: #{basic_block_forward.1} parent=68 // loop_exit
                  _
              $region69: #{basic_block_forward.1} parent=35 // pred_fallthru
                _
            $region36: #{basic_block_forward.1} parent=31 // pred_fallthru
              _
            // Predicated region
            $region37: #{basic_block_forward.1} parent=31 // pred_check
              %p202 = pneg %p198
            $region38: #{basic_block_forward.1} parent=31 // pred_check_branch
              %204 = sbr.rel (%p202) target = $region40
            $region39: #{basic_block_forward.1} parent=31 // pred_region
              %s205 = sshll.u32 1, %s194
              %s206 = ssub.s32 %s205, 1
              loop: start=0, step=1, limit=1
              $region41: #{basic_block_forward.1} parent=39 // loop_pre_header
                _
              $region42: #{basic_block_forward.1} parent=39 // loop_header
                %s208 = sphi 0, %s212
                %p209 = scmp.ge.s32.totalorder %s208, 1
                %s213 = sphi %s193, %s193
                %s214 = sphi %s183, %s183
              $region43: #{basic_block_forward.1} parent=39 // loop_header_branch
                %211 = sbr.rel (%p209) target = $region47
              $region44: #{basic_block_forward.1} parent=39 // loop_body
                %v215 = vld [vmem:[%s213] sm:%s206]
                %216 = vst [vmem:[%s214] sm:%s206] %v215
                %v217 = vld [vmem:[%s213 + $0x1c] sm:%s206]
                %218 = vst [vmem:[%s214 + $0xc] sm:%s206] %v217
                %v219 = vld [vmem:[%s213 + $0x38] sm:%s206]
                %220 = vst [vmem:[%s214 + $0x18] sm:%s206] %v219
                %v221 = vld [vmem:[%s213 + $0x54] sm:%s206]
                %222 = vst [vmem:[%s214 + $0x24] sm:%s206] %v221
              $region45: #{basic_block_forward.1} parent=39 // loop_footer
                %s212 = sadd.s32 1, %s208
              $region46: #{basic_block_forward.1} parent=39 // loop_footer_branch
                %207 = sbr.rel target = $region42
              $region47: #{basic_block_forward.1} parent=39 // loop_exit
                _
            $region40: #{basic_block_forward.1} parent=31 // pred_fallthru
              _
          $region32: #{basic_block_forward.1} parent=27 // pred_fallthru
            _
          %480 = vnop
        $region28: #{basic_block_forward.1} parent=23 // pred_fallthru
          _
        // Predicated region
        $region91: #{basic_block_forward.1} parent=23 // pred_check
          %p481 = pneg %p76
        $region92: #{basic_block_forward.1} parent=23 // pred_check_branch
          %483 = sbr.rel (%p481) target = $region94
        $region93: #{basic_block_forward.1} parent=23 // pred_region
          %s484 = sand.u32 %s66, 1
          %s485 = sand.u32 %s66, 1
          %s486 = smul.addr %s485, 16
          %s487 = scalar_lea.vmem [#allocation4], %s486
          %s488 = sadd.s32 %s18, 1
          %s489 = smul.u32 %s488, 3
          %s490 = smul.addr %s17, 28
          %s491 = sadd.s32 %s489, %s490
          %s492 = smul.addr %s491, 4
          %s493 = scalar_lea.vmem %s1, %s492
          // Predicated region
          $region95: #{basic_block_forward.1} parent=93 // pred_check
            _
          $region96: #{basic_block_forward.1} parent=93 // pred_check_branch
            %495 = sbr.rel (0) target = $region98
          $region97: #{basic_block_forward.1} parent=93 // pred_region
            // Predicated region
            $region99: #{basic_block_forward.1} parent=97 // pred_check
              _
            $region100: #{basic_block_forward.1} parent=97 // pred_check_branch
              %497 = sbr.rel target = $region102
            $region101: #{basic_block_forward.1} parent=97 // pred_region
              // Predicated region
              $region114: #{basic_block_forward.1} parent=101 // pred_check
                _
              $region115: #{basic_block_forward.1} parent=101 // pred_check_branch
                %519 = sbr.rel (0) target = $region117
              $region116: #{basic_block_forward.1} parent=101 // pred_region
                loop: start=0, step=1, limit=1
                $region118: #{basic_block_forward.1} parent=116 // loop_pre_header
                  _
                $region119: #{basic_block_forward.1} parent=116 // loop_header
                  %s521 = sphi 0, %s525
                  %p522 = scmp.ge.s32.totalorder %s521, 1
                  %s526 = sphi %s493, %s493
                  %s527 = sphi %s487, %s487
                $region120: #{basic_block_forward.1} parent=116 // loop_header_branch
                  %524 = sbr.rel (%p522) target = $region124
                $region121: #{basic_block_forward.1} parent=116 // loop_body
                  _
                $region122: #{basic_block_forward.1} parent=116 // loop_footer
                  %s525 = sadd.s32 1, %s521
                $region123: #{basic_block_forward.1} parent=116 // loop_footer_branch
                  %520 = sbr.rel target = $region119
                $region124: #{basic_block_forward.1} parent=116 // loop_exit
                  _
                %s529 = ssub.s32 16, 1
                loop: start=0, step=1, limit=1
                $region125: #{basic_block_forward.1} parent=116 // loop_pre_header
                  _
                $region126: #{basic_block_forward.1} parent=116 // loop_header
                  %s531 = sphi 0, %s535
                  %p532 = scmp.ge.s32.totalorder %s531, 1
                  %s536 = sphi %s493, %s493
                  %s537 = sphi %s487, %s487
                $region127: #{basic_block_forward.1} parent=116 // loop_header_branch
                  %534 = sbr.rel (%p532) target = $region131
                $region128: #{basic_block_forward.1} parent=116 // loop_body
                  %v538 = vld [vmem:[%s536] sm:%s529]
                  %539 = vst [vmem:[%s537] sm:%s529] %v538
                  %v540 = vld [vmem:[%s536 + $0x1c] sm:%s529]
                  %541 = vst [vmem:[%s537 + $0x4] sm:%s529] %v540
                  %v542 = vld [vmem:[%s536 + $0x38] sm:%s529]
                  %543 = vst [vmem:[%s537 + $0x8] sm:%s529] %v542
                  %v544 = vld [vmem:[%s536 + $0x54] sm:%s529]
                  %545 = vst [vmem:[%s537 + $0xc] sm:%s529] %v544
                $region129: #{basic_block_forward.1} parent=116 // loop_footer
                  %s535 = sadd.s32 1, %s531
                $region130: #{basic_block_forward.1} parent=116 // loop_footer_branch
                  %530 = sbr.rel target = $region126
                $region131: #{basic_block_forward.1} parent=116 // loop_exit
                  _
              $region117: #{basic_block_forward.1} parent=101 // pred_fallthru
                _
            $region102: #{basic_block_forward.1} parent=97 // pred_fallthru
              _
            // Predicated region
            $region103: #{basic_block_forward.1} parent=97 // pred_check
              _
            $region104: #{basic_block_forward.1} parent=97 // pred_check_branch
              %499 = sbr.rel (0) target = $region106
            $region105: #{basic_block_forward.1} parent=97 // pred_region
              %s501 = ssub.s32 16, 1
              loop: start=0, step=1, limit=1
              $region107: #{basic_block_forward.1} parent=105 // loop_pre_header
                _
              $region108: #{basic_block_forward.1} parent=105 // loop_header
                %s503 = sphi 0, %s507
                %p504 = scmp.ge.s32.totalorder %s503, 1
                %s508 = sphi %s493, %s493
                %s509 = sphi %s487, %s487
              $region109: #{basic_block_forward.1} parent=105 // loop_header_branch
                %506 = sbr.rel (%p504) target = $region113
              $region110: #{basic_block_forward.1} parent=105 // loop_body
                %v510 = vld [vmem:[%s508] sm:%s501]
                %511 = vst [vmem:[%s509] sm:%s501] %v510
                %v512 = vld [vmem:[%s508 + $0x1c] sm:%s501]
                %513 = vst [vmem:[%s509 + $0x4] sm:%s501] %v512
                %v514 = vld [vmem:[%s508 + $0x38] sm:%s501]
                %515 = vst [vmem:[%s509 + $0x8] sm:%s501] %v514
                %v516 = vld [vmem:[%s508 + $0x54] sm:%s501]
                %517 = vst [vmem:[%s509 + $0xc] sm:%s501] %v516
              $region111: #{basic_block_forward.1} parent=105 // loop_footer
                %s507 = sadd.s32 1, %s503
              $region112: #{basic_block_forward.1} parent=105 // loop_footer_branch
                %502 = sbr.rel target = $region108
              $region113: #{basic_block_forward.1} parent=105 // loop_exit
                _
            $region106: #{basic_block_forward.1} parent=97 // pred_fallthru
              _
          $region98: #{basic_block_forward.1} parent=93 // pred_fallthru
            _
          %546 = vnop
        $region94: #{basic_block_forward.1} parent=23 // pred_fallthru
          _
      $region24: #{basic_block_forward.1} parent=5 // pred_fallthru
        _
      %p547 = scmp.le.s32.totalorder 1, %s10
      %p548 = scmp.lt.s32.totalorder %s10, 5
      %p549 = pnand %p547, %p548
      %p550 = pneg %p549
      // Predicated region
      $region132: #{basic_block_forward.1} parent=5 // pred_check
        _
      $region133: #{basic_block_forward.1} parent=5 // pred_check_branch
        %552 = sbr.rel (%p549) target = $region135
      $region134: #{basic_block_forward.1} parent=5 // pred_region
        %s553 = ssub.s32 %s10, 1
        %s554 = sand.u32 %s37, 1
        %s555 = sand.u32 %s37, 1
        %s556 = smul.addr %s555, 48
        %s557 = scalar_lea.vmem [#allocation3], %s556
        // Predicated region
        $region136: #{basic_block_forward.1} parent=134 // pred_check
          %p558 = pneg %p50
        $region137: #{basic_block_forward.1} parent=134 // pred_check_branch
          %560 = sbr.rel (%p558) target = $region139
        $region138: #{basic_block_forward.1} parent=134 // pred_region
          _
        $region139: #{basic_block_forward.1} parent=134 // pred_fallthru
          _
        %s561 = sand.u32 %s69, 1
        %s562 = sand.u32 %s69, 1
        %s563 = smul.addr %s562, 16
        %s564 = scalar_lea.vmem [#allocation4], %s563
        // Predicated region
        $region140: #{basic_block_forward.1} parent=134 // pred_check
          %p565 = pneg %p82
        $region141: #{basic_block_forward.1} parent=134 // pred_check_branch
          %567 = sbr.rel (%p565) target = $region143
        $region142: #{basic_block_forward.1} parent=134 // pred_region
          _
        $region143: #{basic_block_forward.1} parent=134 // pred_fallthru
          _
        %s568 = sand.u32 %s37, 1
        %s569 = sand.u32 %s37, 1
        %s570 = smul.addr %s569, 48
        %s571 = scalar_lea.vmem [#allocation3], %s570
        %p572 = pneg %p50
        %p573 = pneg %p47
        %s574 = sand.u32 %s69, 1
        %s575 = sand.u32 %s69, 1
        %s576 = smul.addr %s575, 16
        %s577 = scalar_lea.vmem [#allocation4], %s576
        %p578 = pneg %p82
        %p579 = pneg %p79
        %p580 = pneg %p103
        %p581 = pneg %p100
        %p582 = pneg %p124
        %p583 = pneg %p121
        %p584 = pneg %p152
        %p585 = pneg %p149
        %s586 = smul.u32 3, %s20
        %p587 = scmp.lt.s32.totalorder %s19, 1
        %s588 = scalar_select %p587, %s19, 1
        %p589 = scmp.lt.s32.totalorder %s586, 5
        %s590 = scalar_select %p589, %s586, 5
        %s591 = smul.addr %s588, 6
        %s592 = sadd.s32 %s590, %s591
        %s593 = smul.addr %s592, 4
        %s594 = scalar_lea.vmem %s4, %s593
        %s595 = smul.u32 3, %s20
        %s596 = ssub.s32 7, %s595
        %p597 = scmp.lt.s32.totalorder %s596, 3
        %s598 = scalar_select %p597, %s596, 3
        %s599 = smul.u32 16, %s598
        %s600 = sadd.s32 %s20, 1
        %s601 = smul.u32 %s600, 3
        %s602 = smul.u32 3, %s20
        %p603 = scmp.lt.s32.totalorder %s19, 1
        %s604 = scalar_select %p603, %s19, 1
        %p605 = scmp.lt.s32.totalorder %s602, 5
        %s606 = scalar_select %p605, %s602, 5
        %s607 = smul.addr %s604, 6
        %s608 = sadd.s32 %s606, %s607
        %s609 = smul.addr %s608, 4
        %s610 = scalar_lea.vmem %s4, %s609
        %s611 = smul.u32 3, %s20
        %v612 = vld [vmem:[%s557] sm:$0xff]
        %v613 = vld [vmem:[%s557 + $0x8] sm:$0xf]
        %v614 = vld [vmem:[%s557 + $0xc] sm:$0xff]
        %v615 = vld [vmem:[%s557 + $0x14] sm:$0xf]
        %v616 = vld [vmem:[%s557 + $0x18] sm:$0xff]
        %v617 = vld [vmem:[%s557 + $0x20] sm:$0xf]
        %v618 = vld [vmem:[%s557 + $0x24] sm:$0xff]
        %v619 = vld [vmem:[%s557 + $0x2c] sm:$0xf]
        %620 = vst [vmem:[#allocation2] sm:$0xff] %v612
        %621 = vst [vmem:[#allocation2 + $0x8] sm:$0xf] %v613
        %622 = vst [vmem:[#allocation2 + $0xc] sm:$0xff] %v614
        %623 = vst [vmem:[#allocation2 + $0x14] sm:$0xf] %v615
        %624 = vst [vmem:[#allocation2 + $0x18] sm:$0xff] %v616
        %625 = vst [vmem:[#allocation2 + $0x20] sm:$0xf] %v617
        %626 = vst [vmem:[#allocation2 + $0x24] sm:$0xff] %v618
        %627 = vst [vmem:[#allocation2 + $0x2c] sm:$0xf] %v619
        %v628 = vld [vmem:[%s557] sm:$0xff]
        %v629 = vld [vmem:[%s557 + $0x8] sm:$0xf]
        %v630 = vld [vmem:[%s557 + $0xc] sm:$0xff]
        %v631 = vld [vmem:[%s557 + $0x14] sm:$0xf]
        %v632 = vld [vmem:[%s557 + $0x18] sm:$0xff]
        %v633 = vld [vmem:[%s557 + $0x20] sm:$0xf]
        %v634 = vld [vmem:[%s557 + $0x24] sm:$0xff]
        %v635 = vld [vmem:[%s557 + $0x2c] sm:$0xf]
        %644 = vrot.lane.b32.xlu0 %v628, 127
        %v645 = vpop.permute.xlu0 %644
        %646 = vrot.lane.b32.xlu0 %v629, 127
        %v647 = vpop.permute.xlu0 %646
        %648 = vrot.lane.b32.xlu0 %v630, 127
        %v649 = vpop.permute.xlu0 %648
        %650 = vrot.lane.b32.xlu0 %v631, 127
        %v651 = vpop.permute.xlu0 %650
        %652 = vrot.lane.b32.xlu0 %v632, 127
        %v653 = vpop.permute.xlu0 %652
        %654 = vrot.lane.b32.xlu0 %v633, 127
        %v655 = vpop.permute.xlu0 %654
        %656 = vrot.lane.b32.xlu0 %v634, 127
        %v657 = vpop.permute.xlu0 %656
        %658 = vrot.lane.b32.xlu0 %v635, 127
        %v659 = vpop.permute.xlu0 %658
        %v660 = vrot.slane %v645, 4
        %v661 = vrot.slane %v647, 4
        %v662 = vrot.slane %v649, 4
        %v663 = vrot.slane %v651, 4
        %v664 = vrot.slane %v653, 4
        %v665 = vrot.slane %v655, 4
        %v666 = vrot.slane %v657, 4
        %v667 = vrot.slane %v659, 4
        %vm668 = vcmask 1043456
        %v669 = vsel %vm668, %v660, %v661
        %vm670 = vcmask 1039360
        %v671 = vsel %vm670, %v645, %v669
        %v672 = vsel %vm668, %v662, %v663
        %v673 = vsel %vm670, %v649, %v672
        %v674 = vsel %vm668, %v664, %v665
        %v675 = vsel %vm670, %v653, %v674
        %v676 = vsel %vm668, %v666, %v667
        %v677 = vsel %vm670, %v657, %v676
        %686 = vst [vmem:[#allocation2 + $0x30] sm:$0xff] %v671
        %vm687 = vcmask 1035264
        %688 = vst.msk [vmem:[#allocation2 + $0x38] sm:$0xf] %vm687, %v647
        %689 = vst [vmem:[#allocation2 + $0x3c] sm:$0xff] %v673
        %690 = vst.msk [vmem:[#allocation2 + $0x44] sm:$0xf] %vm687, %v651
        %691 = vst [vmem:[#allocation2 + $0x48] sm:$0xff] %v675
        %692 = vst.msk [vmem:[#allocation2 + $0x50] sm:$0xf] %vm687, %v655
        %693 = vst [vmem:[#allocation2 + $0x54] sm:$0xff] %v677
        %694 = vst.msk [vmem:[#allocation2 + $0x5c] sm:$0xf] %vm687, %v659
        %v695 = vld [vmem:[%s564] sm:$0xf]
        %v696 = vld [vmem:[%s564 + $0x4] sm:$0xf]
        %v697 = vld [vmem:[%s564 + $0x8] sm:$0xf]
        %v698 = vld [vmem:[%s564 + $0xc] sm:$0xf]
        %703 = vrot.lane.b32.xlu0 %v695, 127
        %v704 = vpop.permute.xlu0 %703
        %705 = vrot.lane.b32.xlu0 %v696, 127
        %v706 = vpop.permute.xlu0 %705
        %707 = vrot.lane.b32.xlu0 %v697, 127
        %v708 = vpop.permute.xlu0 %707
        %709 = vrot.lane.b32.xlu0 %v698, 127
        %v710 = vpop.permute.xlu0 %709
        %vm715 = vcmask 1044472
        %716 = vst.msk [vmem:[#allocation2 + $0x38] sm:$0xf] %vm715, %v704
        %717 = vst.msk [vmem:[#allocation2 + $0x44] sm:$0xf] %vm715, %v706
        %718 = vst.msk [vmem:[#allocation2 + $0x50] sm:$0xf] %vm715, %v708
        %719 = vst.msk [vmem:[#allocation2 + $0x5c] sm:$0xf] %vm715, %v710
        %v720 = vld [vmem:[%s557] sm:$0xff]
        %v721 = vld [vmem:[%s557 + $0x8] sm:$0xf]
        %v722 = vld [vmem:[%s557 + $0xc] sm:$0xff]
        %v723 = vld [vmem:[%s557 + $0x14] sm:$0xf]
        %v724 = vld [vmem:[%s557 + $0x18] sm:$0xff]
        %v725 = vld [vmem:[%s557 + $0x20] sm:$0xf]
        %v726 = vld [vmem:[%s557 + $0x24] sm:$0xff]
        %v727 = vld [vmem:[%s557 + $0x2c] sm:$0xf]
        %736 = vrot.lane.b32.xlu0 %v720, 119
        %v737 = vpop.permute.xlu0 %736
        %738 = vrot.lane.b32.xlu0 %v721, 119
        %v739 = vpop.permute.xlu0 %738
        %740 = vrot.lane.b32.xlu0 %v722, 119
        %v741 = vpop.permute.xlu0 %740
        %742 = vrot.lane.b32.xlu0 %v723, 119
        %v743 = vpop.permute.xlu0 %742
        %744 = vrot.lane.b32.xlu0 %v724, 119
        %v745 = vpop.permute.xlu0 %744
        %746 = vrot.lane.b32.xlu0 %v725, 119
        %v747 = vpop.permute.xlu0 %746
        %748 = vrot.lane.b32.xlu0 %v726, 119
        %v749 = vpop.permute.xlu0 %748
        %750 = vrot.lane.b32.xlu0 %v727, 119
        %v751 = vpop.permute.xlu0 %750
        %v752 = vrot.slane %v737, 4
        %v753 = vrot.slane %v739, 4
        %v754 = vrot.slane %v741, 4
        %v755 = vrot.slane %v743, 4
        %v756 = vrot.slane %v745, 4
        %v757 = vrot.slane %v747, 4
        %v758 = vrot.slane %v749, 4
        %v759 = vrot.slane %v751, 4
        %v760 = vsel %vm668, %v752, %v753
        %vm761 = vcmask 973824
        %v762 = vsel %vm761, %v737, %v760
        %v763 = vsel %vm668, %v754, %v755
        %v764 = vsel %vm761, %v741, %v763
        %v765 = vsel %vm668, %v756, %v757
        %v766 = vsel %vm761, %v745, %v765
        %v767 = vsel %vm668, %v758, %v759
        %v768 = vsel %vm761, %v749, %v767
        %777 = vst [vmem:[#allocation2 + $0x60] sm:$0xff] %v762
        %vm778 = vcmask 969728
        %779 = vst.msk [vmem:[#allocation2 + $0x68] sm:$0xf] %vm778, %v739
        %780 = vst [vmem:[#allocation2 + $0x6c] sm:$0xff] %v764
        %781 = vst.msk [vmem:[#allocation2 + $0x74] sm:$0xf] %vm778, %v743
        %782 = vst [vmem:[#allocation2 + $0x78] sm:$0xff] %v766
        %783 = vst.msk [vmem:[#allocation2 + $0x80] sm:$0xf] %vm778, %v747
        %784 = vst [vmem:[#allocation2 + $0x84] sm:$0xff] %v768
        %785 = vst.msk [vmem:[#allocation2 + $0x8c] sm:$0xf] %vm778, %v751
        %v786 = vld [vmem:[%s564] sm:$0xf]
        %v787 = vld [vmem:[%s564 + $0x4] sm:$0xf]
        %v788 = vld [vmem:[%s564 + $0x8] sm:$0xf]
        %v789 = vld [vmem:[%s564 + $0xc] sm:$0xf]
        %794 = vrot.lane.b32.xlu0 %v786, 119
        %v795 = vpop.permute.xlu0 %794
        %796 = vrot.lane.b32.xlu0 %v787, 119
        %v797 = vpop.permute.xlu0 %796
        %798 = vrot.lane.b32.xlu0 %v788, 119
        %v799 = vpop.permute.xlu0 %798
        %800 = vrot.lane.b32.xlu0 %v789, 119
        %v801 = vpop.permute.xlu0 %800
        %vm806 = vcmask 1044408
        %807 = vst.msk [vmem:[#allocation2 + $0x68] sm:$0xf] %vm806, %v795
        %808 = vst.msk [vmem:[#allocation2 + $0x74] sm:$0xf] %vm806, %v797
        %809 = vst.msk [vmem:[#allocation2 + $0x80] sm:$0xf] %vm806, %v799
        %810 = vst.msk [vmem:[#allocation2 + $0x8c] sm:$0xf] %vm806, %v801
        %v811 = vld [vmem:[%s557] sm:$0xff]
        %v812 = vld [vmem:[%s557 + $0x8] sm:$0xf]
        %v813 = vld [vmem:[%s557 + $0xc] sm:$0xff]
        %v814 = vld [vmem:[%s557 + $0x14] sm:$0xf]
        %v815 = vld [vmem:[%s557 + $0x18] sm:$0xff]
        %v816 = vld [vmem:[%s557 + $0x20] sm:$0xf]
        %v817 = vld [vmem:[%s557 + $0x24] sm:$0xff]
        %v818 = vld [vmem:[%s557 + $0x2c] sm:$0xf]
        %827 = vrot.lane.b32.xlu0 %v811, 118
        %v828 = vpop.permute.xlu0 %827
        %829 = vrot.lane.b32.xlu0 %v812, 118
        %v830 = vpop.permute.xlu0 %829
        %831 = vrot.lane.b32.xlu0 %v813, 118
        %v832 = vpop.permute.xlu0 %831
        %833 = vrot.lane.b32.xlu0 %v814, 118
        %v834 = vpop.permute.xlu0 %833
        %835 = vrot.lane.b32.xlu0 %v815, 118
        %v836 = vpop.permute.xlu0 %835
        %837 = vrot.lane.b32.xlu0 %v816, 118
        %v838 = vpop.permute.xlu0 %837
        %839 = vrot.lane.b32.xlu0 %v817, 118
        %v840 = vpop.permute.xlu0 %839
        %841 = vrot.lane.b32.xlu0 %v818, 118
        %v842 = vpop.permute.xlu0 %841
        %v843 = vrot.slane %v828, 4
        %v844 = vrot.slane %v830, 4
        %v845 = vrot.slane %v832, 4
        %v846 = vrot.slane %v834, 4
        %v847 = vrot.slane %v836, 4
        %v848 = vrot.slane %v838, 4
        %v849 = vrot.slane %v840, 4
        %v850 = vrot.slane %v842, 4
        %v851 = vsel %vm668, %v843, %v844
        %vm852 = vcmask 965632
        %v853 = vsel %vm852, %v828, %v851
        %v854 = vsel %vm668, %v845, %v846
        %v855 = vsel %vm852, %v832, %v854
        %v856 = vsel %vm668, %v847, %v848
        %v857 = vsel %vm852, %v836, %v856
        %v858 = vsel %vm668, %v849, %v850
        %v859 = vsel %vm852, %v840, %v858
        %868 = vst [vmem:[#allocation2 + $0x90] sm:$0xff] %v853
        %vm869 = vcmask 961536
        %870 = vst.msk [vmem:[#allocation2 + $0x98] sm:$0xf] %vm869, %v830
        %871 = vst [vmem:[#allocation2 + $0x9c] sm:$0xff] %v855
        %872 = vst.msk [vmem:[#allocation2 + $0xa4] sm:$0xf] %vm869, %v834
        %873 = vst [vmem:[#allocation2 + $0xa8] sm:$0xff] %v857
        %874 = vst.msk [vmem:[#allocation2 + $0xb0] sm:$0xf] %vm869, %v838
        %875 = vst [vmem:[#allocation2 + $0xb4] sm:$0xff] %v859
        %876 = vst.msk [vmem:[#allocation2 + $0xbc] sm:$0xf] %vm869, %v842
        %v877 = vld [vmem:[%s564] sm:$0xf]
        %v878 = vld [vmem:[%s564 + $0x4] sm:$0xf]
        %v879 = vld [vmem:[%s564 + $0x8] sm:$0xf]
        %v880 = vld [vmem:[%s564 + $0xc] sm:$0xf]
        %885 = vrot.lane.b32.xlu0 %v877, 118
        %v886 = vpop.permute.xlu0 %885
        %887 = vrot.lane.b32.xlu0 %v878, 118
        %v888 = vpop.permute.xlu0 %887
        %889 = vrot.lane.b32.xlu0 %v879, 118
        %v890 = vpop.permute.xlu0 %889
        %891 = vrot.lane.b32.xlu0 %v880, 118
        %v892 = vpop.permute.xlu0 %891
        %vm897 = vcmask 1044400
        %898 = vst.msk [vmem:[#allocation2 + $0x98] sm:$0xf] %vm897, %v886
        %899 = vst.msk [vmem:[#allocation2 + $0xa4] sm:$0xf] %vm897, %v888
        %900 = vst.msk [vmem:[#allocation2 + $0xb0] sm:$0xf] %vm897, %v890
        %901 = vst.msk [vmem:[#allocation2 + $0xbc] sm:$0xf] %vm897, %v892
        %v902 = vld [vmem:[%s557] sm:$0xff]
        %v903 = vld [vmem:[%s557 + $0x8] sm:$0xf]
        %v904 = vld [vmem:[%s557 + $0xc] sm:$0xff]
        %v905 = vld [vmem:[%s557 + $0x14] sm:$0xf]
        %v906 = vld [vmem:[%s557 + $0x18] sm:$0xff]
        %v907 = vld [vmem:[%s557 + $0x20] sm:$0xf]
        %v908 = vld [vmem:[%s557 + $0x24] sm:$0xff]
        %v909 = vld [vmem:[%s557 + $0x2c] sm:$0xf]
        %918 = vrot.lane.b32.xlu0 %v902, 47
        %v919 = vpop.permute.xlu0 %918
        %920 = vrot.lane.b32.xlu0 %v903, 47
        %v921 = vpop.permute.xlu0 %920
        %922 = vrot.lane.b32.xlu0 %v904, 47
        %v923 = vpop.permute.xlu0 %922
        %924 = vrot.lane.b32.xlu0 %v905, 47
        %v925 = vpop.permute.xlu0 %924
        %926 = vrot.lane.b32.xlu0 %v906, 47
        %v927 = vpop.permute.xlu0 %926
        %928 = vrot.lane.b32.xlu0 %v907, 47
        %v929 = vpop.permute.xlu0 %928
        %930 = vrot.lane.b32.xlu0 %v908, 47
        %v931 = vpop.permute.xlu0 %930
        %932 = vrot.lane.b32.xlu0 %v909, 47
        %v933 = vpop.permute.xlu0 %932
        %v934 = vrot.slane %v919, 4
        %v935 = vrot.slane %v921, 4
        %v936 = vrot.slane %v923, 4
        %v937 = vrot.slane %v925, 4
        %v938 = vrot.slane %v927, 4
        %v939 = vrot.slane %v929, 4
        %v940 = vrot.slane %v931, 4
        %v941 = vrot.slane %v933, 4
        %v942 = vsel %vm668, %v934, %v935
        %vm943 = vcmask 384000
        %v944 = vsel %vm943, %v919, %v942
        %v945 = vsel %vm668, %v936, %v937
        %v946 = vsel %vm943, %v923, %v945
        %v947 = vsel %vm668, %v938, %v939
        %v948 = vsel %vm943, %v927, %v947
        %v949 = vsel %vm668, %v940, %v941
        %v950 = vsel %vm943, %v931, %v949
        %959 = vst [vmem:[#allocation2 + $0xc0] sm:$0xff] %v944
        %vm960 = vcmask 379904
        %961 = vst.msk [vmem:[#allocation2 + $0xc8] sm:$0xf] %vm960, %v921
        %962 = vst [vmem:[#allocation2 + $0xcc] sm:$0xff] %v946
        %963 = vst.msk [vmem:[#allocation2 + $0xd4] sm:$0xf] %vm960, %v925
        %964 = vst [vmem:[#allocation2 + $0xd8] sm:$0xff] %v948
        %965 = vst.msk [vmem:[#allocation2 + $0xe0] sm:$0xf] %vm960, %v929
        %966 = vst [vmem:[#allocation2 + $0xe4] sm:$0xff] %v950
        %967 = vst.msk [vmem:[#allocation2 + $0xec] sm:$0xf] %vm960, %v933
        %v968 = vld [vmem:[%s564] sm:$0xf]
        %v969 = vld [vmem:[%s564 + $0x4] sm:$0xf]
        %v970 = vld [vmem:[%s564 + $0x8] sm:$0xf]
        %v971 = vld [vmem:[%s564 + $0xc] sm:$0xf]
        %976 = vrot.lane.b32.xlu0 %v968, 47
        %v977 = vpop.permute.xlu0 %976
        %978 = vrot.lane.b32.xlu0 %v969, 47
        %v979 = vpop.permute.xlu0 %978
        %980 = vrot.lane.b32.xlu0 %v970, 47
        %v981 = vpop.permute.xlu0 %980
        %982 = vrot.lane.b32.xlu0 %v971, 47
        %v983 = vpop.permute.xlu0 %982
        %vm988 = vcmask 1043832
        %989 = vst.msk [vmem:[#allocation2 + $0xc8] sm:$0xf] %vm988, %v977
        %990 = vst.msk [vmem:[#allocation2 + $0xd4] sm:$0xf] %vm988, %v979
        %991 = vst.msk [vmem:[#allocation2 + $0xe0] sm:$0xf] %vm988, %v981
        %992 = vst.msk [vmem:[#allocation2 + $0xec] sm:$0xf] %vm988, %v983
        %v993 = vld [vmem:[%s557] sm:$0xff]
        %v994 = vld [vmem:[%s557 + $0x8] sm:$0xf]
        %v995 = vld [vmem:[%s557 + $0xc] sm:$0xff]
        %v996 = vld [vmem:[%s557 + $0x14] sm:$0xf]
        %v997 = vld [vmem:[%s557 + $0x18] sm:$0xff]
        %v998 = vld [vmem:[%s557 + $0x20] sm:$0xf]
        %v999 = vld [vmem:[%s557 + $0x24] sm:$0xff]
        %v1000 = vld [vmem:[%s557 + $0x2c] sm:$0xf]
        %1009 = vrot.lane.b32.xlu0 %v993, 46
        %v1010 = vpop.permute.xlu0 %1009
        %1011 = vrot.lane.b32.xlu0 %v994, 46
        %v1012 = vpop.permute.xlu0 %1011
        %1013 = vrot.lane.b32.xlu0 %v995, 46
        %v1014 = vpop.permute.xlu0 %1013
        %1015 = vrot.lane.b32.xlu0 %v996, 46
        %v1016 = vpop.permute.xlu0 %1015
        %1017 = vrot.lane.b32.xlu0 %v997, 46
        %v1018 = vpop.permute.xlu0 %1017
        %1019 = vrot.lane.b32.xlu0 %v998, 46
        %v1020 = vpop.permute.xlu0 %1019
        %1021 = vrot.lane.b32.xlu0 %v999, 46
        %v1022 = vpop.permute.xlu0 %1021
        %1023 = vrot.lane.b32.xlu0 %v1000, 46
        %v1024 = vpop.permute.xlu0 %1023
        %v1025 = vrot.slane %v1010, 4
        %v1026 = vrot.slane %v1012, 4
        %v1027 = vrot.slane %v1014, 4
        %v1028 = vrot.slane %v1016, 4
        %v1029 = vrot.slane %v1018, 4
        %v1030 = vrot.slane %v1020, 4
        %v1031 = vrot.slane %v1022, 4
        %v1032 = vrot.slane %v1024, 4
        %v1033 = vsel %vm668, %v1025, %v1026
        %vm1034 = vcmask 375808
        %v1035 = vsel %vm1034, %v1010, %v1033
        %v1036 = vsel %vm668, %v1027, %v1028
        %v1037 = vsel %vm1034, %v1014, %v1036
        %v1038 = vsel %vm668, %v1029, %v1030
        %v1039 = vsel %vm1034, %v1018, %v1038
        %v1040 = vsel %vm668, %v1031, %v1032
        %v1041 = vsel %vm1034, %v1022, %v1040
        %1050 = vst [vmem:[#allocation2 + $0xf0] sm:$0xff] %v1035
        %vm1051 = vcmask 371712
        %1052 = vst.msk [vmem:[#allocation2 + $0xf8] sm:$0xf] %vm1051, %v1012
        %1053 = vst [vmem:[#allocation2 + $0xfc] sm:$0xff] %v1037
        %1054 = vst.msk [vmem:[#allocation2 + $0x104] sm:$0xf] %vm1051, %v1016
        %1055 = vst [vmem:[#allocation2 + $0x108] sm:$0xff] %v1039
        %1056 = vst.msk [vmem:[#allocation2 + $0x110] sm:$0xf] %vm1051, %v1020
        %1057 = vst [vmem:[#allocation2 + $0x114] sm:$0xff] %v1041
        %1058 = vst.msk [vmem:[#allocation2 + $0x11c] sm:$0xf] %vm1051, %v1024
        %v1059 = vld [vmem:[%s564] sm:$0xf]
        %v1060 = vld [vmem:[%s564 + $0x4] sm:$0xf]
        %v1061 = vld [vmem:[%s564 + $0x8] sm:$0xf]
        %v1062 = vld [vmem:[%s564 + $0xc] sm:$0xf]
        %1067 = vrot.lane.b32.xlu0 %v1059, 46
        %v1068 = vpop.permute.xlu0 %1067
        %1069 = vrot.lane.b32.xlu0 %v1060, 46
        %v1070 = vpop.permute.xlu0 %1069
        %1071 = vrot.lane.b32.xlu0 %v1061, 46
        %v1072 = vpop.permute.xlu0 %1071
        %1073 = vrot.lane.b32.xlu0 %v1062, 46
        %v1074 = vpop.permute.xlu0 %1073
        %vm1079 = vcmask 1043824
        %1080 = vst.msk [vmem:[#allocation2 + $0xf8] sm:$0xf] %vm1079, %v1068
        %1081 = vst.msk [vmem:[#allocation2 + $0x104] sm:$0xf] %vm1079, %v1070
        %1082 = vst.msk [vmem:[#allocation2 + $0x110] sm:$0xf] %vm1079, %v1072
        %1083 = vst.msk [vmem:[#allocation2 + $0x11c] sm:$0xf] %vm1079, %v1074
        %v1084 = vld [vmem:[%s557] sm:$0xff]
        %v1085 = vld [vmem:[%s557 + $0x8] sm:$0xf]
        %v1086 = vld [vmem:[%s557 + $0xc] sm:$0xff]
        %v1087 = vld [vmem:[%s557 + $0x14] sm:$0xf]
        %v1088 = vld [vmem:[%s557 + $0x18] sm:$0xff]
        %v1089 = vld [vmem:[%s557 + $0x20] sm:$0xf]
        %v1090 = vld [vmem:[%s557 + $0x24] sm:$0xff]
        %v1091 = vld [vmem:[%s557 + $0x2c] sm:$0xf]
        %1100 = vrot.lane.b32.xlu0 %v1084, 38
        %v1101 = vpop.permute.xlu0 %1100
        %1102 = vrot.lane.b32.xlu0 %v1085, 38
        %v1103 = vpop.permute.xlu0 %1102
        %1104 = vrot.lane.b32.xlu0 %v1086, 38
        %v1105 = vpop.permute.xlu0 %1104
        %1106 = vrot.lane.b32.xlu0 %v1087, 38
        %v1107 = vpop.permute.xlu0 %1106
        %1108 = vrot.lane.b32.xlu0 %v1088, 38
        %v1109 = vpop.permute.xlu0 %1108
        %1110 = vrot.lane.b32.xlu0 %v1089, 38
        %v1111 = vpop.permute.xlu0 %1110
        %1112 = vrot.lane.b32.xlu0 %v1090, 38
        %v1113 = vpop.permute.xlu0 %1112
        %1114 = vrot.lane.b32.xlu0 %v1091, 38
        %v1115 = vpop.permute.xlu0 %1114
        %v1116 = vrot.slane %v1101, 4
        %v1117 = vrot.slane %v1103, 4
        %v1118 = vrot.slane %v1105, 4
        %v1119 = vrot.slane %v1107, 4
        %v1120 = vrot.slane %v1109, 4
        %v1121 = vrot.slane %v1111, 4
        %v1122 = vrot.slane %v1113, 4
        %v1123 = vrot.slane %v1115, 4
        %v1124 = vsel %vm668, %v1116, %v1117
        %vm1125 = vcmask 310272
        %v1126 = vsel %vm1125, %v1101, %v1124
        %v1127 = vsel %vm668, %v1118, %v1119
        %v1128 = vsel %vm1125, %v1105, %v1127
        %v1129 = vsel %vm668, %v1120, %v1121
        %v1130 = vsel %vm1125, %v1109, %v1129
        %v1131 = vsel %vm668, %v1122, %v1123
        %v1132 = vsel %vm1125, %v1113, %v1131
        %1141 = vst [vmem:[#allocation2 + $0x120] sm:$0xff] %v1126
        %vm1142 = vcmask 306176
        %1143 = vst.msk [vmem:[#allocation2 + $0x128] sm:$0xf] %vm1142, %v1103
        %1144 = vst [vmem:[#allocation2 + $0x12c] sm:$0xff] %v1128
        %1145 = vst.msk [vmem:[#allocation2 + $0x134] sm:$0xf] %vm1142, %v1107
        %1146 = vst [vmem:[#allocation2 + $0x138] sm:$0xff] %v1130
        %1147 = vst.msk [vmem:[#allocation2 + $0x140] sm:$0xf] %vm1142, %v1111
        %1148 = vst [vmem:[#allocation2 + $0x144] sm:$0xff] %v1132
        %1149 = vst.msk [vmem:[#allocation2 + $0x14c] sm:$0xf] %vm1142, %v1115
        %v1150 = vld [vmem:[%s564] sm:$0xf]
        %v1151 = vld [vmem:[%s564 + $0x4] sm:$0xf]
        %v1152 = vld [vmem:[%s564 + $0x8] sm:$0xf]
        %v1153 = vld [vmem:[%s564 + $0xc] sm:$0xf]
        %1158 = vrot.lane.b32.xlu0 %v1150, 38
        %v1159 = vpop.permute.xlu0 %1158
        %1160 = vrot.lane.b32.xlu0 %v1151, 38
        %v1161 = vpop.permute.xlu0 %1160
        %1162 = vrot.lane.b32.xlu0 %v1152, 38
        %v1163 = vpop.permute.xlu0 %1162
        %1164 = vrot.lane.b32.xlu0 %v1153, 38
        %v1165 = vpop.permute.xlu0 %1164
        %vm1170 = vcmask 1043760
        %1171 = vst.msk [vmem:[#allocation2 + $0x128] sm:$0xf] %vm1170, %v1159
        %1172 = vst.msk [vmem:[#allocation2 + $0x134] sm:$0xf] %vm1170, %v1161
        %1173 = vst.msk [vmem:[#allocation2 + $0x140] sm:$0xf] %vm1170, %v1163
        %1174 = vst.msk [vmem:[#allocation2 + $0x14c] sm:$0xf] %vm1170, %v1165
        %v1175 = vld [vmem:[%s557] sm:$0xff]
        %v1176 = vld [vmem:[%s557 + $0x8] sm:$0xf]
        %v1177 = vld [vmem:[%s557 + $0xc] sm:$0xff]
        %v1178 = vld [vmem:[%s557 + $0x14] sm:$0xf]
        %v1179 = vld [vmem:[%s557 + $0x18] sm:$0xff]
        %v1180 = vld [vmem:[%s557 + $0x20] sm:$0xf]
        %v1181 = vld [vmem:[%s557 + $0x24] sm:$0xff]
        %v1182 = vld [vmem:[%s557 + $0x2c] sm:$0xf]
        %1191 = vrot.lane.b32.xlu0 %v1175, 37
        %v1192 = vpop.permute.xlu0 %1191
        %1193 = vrot.lane.b32.xlu0 %v1176, 37
        %v1194 = vpop.permute.xlu0 %1193
        %1195 = vrot.lane.b32.xlu0 %v1177, 37
        %v1196 = vpop.permute.xlu0 %1195
        %1197 = vrot.lane.b32.xlu0 %v1178, 37
        %v1198 = vpop.permute.xlu0 %1197
        %1199 = vrot.lane.b32.xlu0 %v1179, 37
        %v1200 = vpop.permute.xlu0 %1199
        %1201 = vrot.lane.b32.xlu0 %v1180, 37
        %v1202 = vpop.permute.xlu0 %1201
        %1203 = vrot.lane.b32.xlu0 %v1181, 37
        %v1204 = vpop.permute.xlu0 %1203
        %1205 = vrot.lane.b32.xlu0 %v1182, 37
        %v1206 = vpop.permute.xlu0 %1205
        %v1207 = vrot.slane %v1192, 4
        %v1208 = vrot.slane %v1194, 4
        %v1209 = vrot.slane %v1196, 4
        %v1210 = vrot.slane %v1198, 4
        %v1211 = vrot.slane %v1200, 4
        %v1212 = vrot.slane %v1202, 4
        %v1213 = vrot.slane %v1204, 4
        %v1214 = vrot.slane %v1206, 4
        %v1215 = vsel %vm668, %v1207, %v1208
        %vm1216 = vcmask 302080
        %v1217 = vsel %vm1216, %v1192, %v1215
        %v1218 = vsel %vm668, %v1209, %v1210
        %v1219 = vsel %vm1216, %v1196, %v1218
        %v1220 = vsel %vm668, %v1211, %v1212
        %v1221 = vsel %vm1216, %v1200, %v1220
        %v1222 = vsel %vm668, %v1213, %v1214
        %v1223 = vsel %vm1216, %v1204, %v1222
        %1232 = vst [vmem:[#allocation2 + $0x150] sm:$0xff] %v1217
        %vm1233 = vcmask 297984
        %1234 = vst.msk [vmem:[#allocation2 + $0x158] sm:$0xf] %vm1233, %v1194
        %1235 = vst [vmem:[#allocation2 + $0x15c] sm:$0xff] %v1219
        %1236 = vst.msk [vmem:[#allocation2 + $0x164] sm:$0xf] %vm1233, %v1198
        %1237 = vst [vmem:[#allocation2 + $0x168] sm:$0xff] %v1221
        %1238 = vst.msk [vmem:[#allocation2 + $0x170] sm:$0xf] %vm1233, %v1202
        %1239 = vst [vmem:[#allocation2 + $0x174] sm:$0xff] %v1223
        %1240 = vst.msk [vmem:[#allocation2 + $0x17c] sm:$0xf] %vm1233, %v1206
        %v1241 = vld [vmem:[%s564] sm:$0xf]
        %v1242 = vld [vmem:[%s564 + $0x4] sm:$0xf]
        %v1243 = vld [vmem:[%s564 + $0x8] sm:$0xf]
        %v1244 = vld [vmem:[%s564 + $0xc] sm:$0xf]
        %1249 = vrot.lane.b32.xlu0 %v1241, 37
        %v1250 = vpop.permute.xlu0 %1249
        %1251 = vrot.lane.b32.xlu0 %v1242, 37
        %v1252 = vpop.permute.xlu0 %1251
        %1253 = vrot.lane.b32.xlu0 %v1243, 37
        %v1254 = vpop.permute.xlu0 %1253
        %1255 = vrot.lane.b32.xlu0 %v1244, 37
        %v1256 = vpop.permute.xlu0 %1255
        %vm1261 = vcmask 1043752
        %1262 = vst.msk [vmem:[#allocation2 + $0x158] sm:$0xf] %vm1261, %v1250
        %1263 = vst.msk [vmem:[#allocation2 + $0x164] sm:$0xf] %vm1261, %v1252
        %1264 = vst.msk [vmem:[#allocation2 + $0x170] sm:$0xf] %vm1261, %v1254
        %1265 = vst.msk [vmem:[#allocation2 + $0x17c] sm:$0xf] %vm1261, %v1256
        %v1266 = vld [vmem:[%s2] sm:$0xff]
        %v1267 = vld [vmem:[#allocation2] sm:$0xff]
        %v1268 = vld [vmem:[#allocation2 + $0x8] sm:$0xf]
        %v1269 = vld [vmem:[#allocation2 + $0xc] sm:$0xff]
        %v1270 = vld [vmem:[#allocation2 + $0x14] sm:$0xf]
        %v1271 = vld [vmem:[#allocation2 + $0x18] sm:$0xff]
        %v1272 = vld [vmem:[#allocation2 + $0x20] sm:$0xf]
        %v1273 = vld [vmem:[#allocation2 + $0x24] sm:$0xff]
        %v1274 = vld [vmem:[#allocation2 + $0x2c] sm:$0xf]
        %v1275 = vld [vmem:[#allocation2 + $0x30] sm:$0xff]
        %v1276 = vld [vmem:[#allocation2 + $0x38] sm:$0xf]
        %v1277 = vld [vmem:[#allocation2 + $0x3c] sm:$0xff]
        %v1278 = vld [vmem:[#allocation2 + $0x44] sm:$0xf]
        %v1279 = vld [vmem:[#allocation2 + $0x48] sm:$0xff]
        %v1280 = vld [vmem:[#allocation2 + $0x50] sm:$0xf]
        %v1281 = vld [vmem:[#allocation2 + $0x54] sm:$0xff]
        %v1282 = vld [vmem:[#allocation2 + $0x5c] sm:$0xf]
        %v1283 = vld [vmem:[#allocation2 + $0x60] sm:$0xff]
        %v1284 = vld [vmem:[#allocation2 + $0x68] sm:$0xf]
        %v1285 = vld [vmem:[#allocation2 + $0x6c] sm:$0xff]
        %v1286 = vld [vmem:[#allocation2 + $0x74] sm:$0xf]
        %v1287 = vld [vmem:[#allocation2 + $0x78] sm:$0xff]
        %v1288 = vld [vmem:[#allocation2 + $0x80] sm:$0xf]
        %v1289 = vld [vmem:[#allocation2 + $0x84] sm:$0xff]
        %v1290 = vld [vmem:[#allocation2 + $0x8c] sm:$0xf]
        %v1291 = vld [vmem:[#allocation2 + $0x90] sm:$0xff]
        %v1292 = vld [vmem:[#allocation2 + $0x98] sm:$0xf]
        %v1293 = vld [vmem:[#allocation2 + $0x9c] sm:$0xff]
        %v1294 = vld [vmem:[#allocation2 + $0xa4] sm:$0xf]
        %v1295 = vld [vmem:[#allocation2 + $0xa8] sm:$0xff]
        %v1296 = vld [vmem:[#allocation2 + $0xb0] sm:$0xf]
        %v1297 = vld [vmem:[#allocation2 + $0xb4] sm:$0xff]
        %v1298 = vld [vmem:[#allocation2 + $0xbc] sm:$0xf]
        %v1299 = vld [vmem:[#allocation2 + $0xc0] sm:$0xff]
        %v1300 = vld [vmem:[#allocation2 + $0xc8] sm:$0xf]
        %v1301 = vld [vmem:[#allocation2 + $0xcc] sm:$0xff]
        %v1302 = vld [vmem:[#allocation2 + $0xd4] sm:$0xf]
        %v1303 = vld [vmem:[#allocation2 + $0xd8] sm:$0xff]
        %v1304 = vld [vmem:[#allocation2 + $0xe0] sm:$0xf]
        %v1305 = vld [vmem:[#allocation2 + $0xe4] sm:$0xff]
        %v1306 = vld [vmem:[#allocation2 + $0xec] sm:$0xf]
        %v1307 = vld [vmem:[#allocation2 + $0xf0] sm:$0xff]
        %v1308 = vld [vmem:[#allocation2 + $0xf8] sm:$0xf]
        %v1309 = vld [vmem:[#allocation2 + $0xfc] sm:$0xff]
        %v1310 = vld [vmem:[#allocation2 + $0x104] sm:$0xf]
        %v1311 = vld [vmem:[#allocation2 + $0x108] sm:$0xff]
        %v1312 = vld [vmem:[#allocation2 + $0x110] sm:$0xf]
        %v1313 = vld [vmem:[#allocation2 + $0x114] sm:$0xff]
        %v1314 = vld [vmem:[#allocation2 + $0x11c] sm:$0xf]
        %v1315 = vld [vmem:[#allocation2 + $0x120] sm:$0xff]
        %v1316 = vld [vmem:[#allocation2 + $0x128] sm:$0xf]
        %v1317 = vld [vmem:[#allocation2 + $0x12c] sm:$0xff]
        %v1318 = vld [vmem:[#allocation2 + $0x134] sm:$0xf]
        %v1319 = vld [vmem:[#allocation2 + $0x138] sm:$0xff]
        %v1320 = vld [vmem:[#allocation2 + $0x140] sm:$0xf]
        %v1321 = vld [vmem:[#allocation2 + $0x144] sm:$0xff]
        %v1322 = vld [vmem:[#allocation2 + $0x14c] sm:$0xf]
        %v1323 = vld [vmem:[#allocation2 + $0x150] sm:$0xff]
        %v1324 = vld [vmem:[#allocation2 + $0x158] sm:$0xf]
        %v1325 = vld [vmem:[#allocation2 + $0x15c] sm:$0xff]
        %v1326 = vld [vmem:[#allocation2 + $0x164] sm:$0xf]
        %v1327 = vld [vmem:[#allocation2 + $0x168] sm:$0xff]
        %v1328 = vld [vmem:[#allocation2 + $0x170] sm:$0xf]
        %v1329 = vld [vmem:[#allocation2 + $0x174] sm:$0xff]
        %v1330 = vld [vmem:[#allocation2 + $0x17c] sm:$0xf]
        %v1331 = vld [vmem:[%s3] sm:$0xff]
        %1333 = vset.pattern.permute.xlu0 0
        %1334 = vperm.xlu0 %1333, %v1331
        %v1335 = vpop.permute.xlu0 %1334
        %v1338 = vunpack.c.l.b16 %v1266
        %v1339 = vunpack.c.h.b16 %v1266
        %v1340 = vpack.c.b16 %v1338, %v1338
        %v1341 = vpack.c.b16 %v1339, %v1339
        %v1408 = vunpack.c.l.b16 %v1267
        %v1409 = vunpack.c.h.b16 %v1267
        %v1410 = vunpack.c.l.b16 %v1268
        %v1411 = vunpack.c.l.b16 %v1269
        %v1412 = vunpack.c.h.b16 %v1269
        %v1413 = vunpack.c.l.b16 %v1270
        %v1414 = vunpack.c.l.b16 %v1271
        %v1415 = vunpack.c.h.b16 %v1271
        %v1416 = vunpack.c.l.b16 %v1272
        %v1417 = vunpack.c.l.b16 %v1273
        %v1418 = vunpack.c.h.b16 %v1273
        %v1419 = vunpack.c.l.b16 %v1274
        %v1420 = vunpack.c.l.b16 %v1275
        %v1421 = vunpack.c.h.b16 %v1275
        %v1422 = vunpack.c.l.b16 %v1276
        %v1423 = vunpack.c.l.b16 %v1277
        %v1424 = vunpack.c.h.b16 %v1277
        %v1425 = vunpack.c.l.b16 %v1278
        %v1426 = vunpack.c.l.b16 %v1279
        %v1427 = vunpack.c.h.b16 %v1279
        %v1428 = vunpack.c.l.b16 %v1280
        %v1429 = vunpack.c.l.b16 %v1281
        %v1430 = vunpack.c.h.b16 %v1281
        %v1431 = vunpack.c.l.b16 %v1282
        %v1432 = vunpack.c.l.b16 %v1283
        %v1433 = vunpack.c.h.b16 %v1283
        %v1434 = vunpack.c.l.b16 %v1284
        %v1435 = vunpack.c.l.b16 %v1285
        %v1436 = vunpack.c.h.b16 %v1285
        %v1437 = vunpack.c.l.b16 %v1286
        %v1438 = vunpack.c.l.b16 %v1287
        %v1439 = vunpack.c.h.b16 %v1287
        %v1440 = vunpack.c.l.b16 %v1288
        %v1441 = vunpack.c.l.b16 %v1289
        %v1442 = vunpack.c.h.b16 %v1289
        %v1443 = vunpack.c.l.b16 %v1290
        %v1444 = vunpack.c.l.b16 %v1291
        %v1445 = vunpack.c.h.b16 %v1291
        %v1446 = vunpack.c.l.b16 %v1292
        %v1447 = vunpack.c.l.b16 %v1293
        %v1448 = vunpack.c.h.b16 %v1293
        %v1449 = vunpack.c.l.b16 %v1294
        %v1450 = vunpack.c.l.b16 %v1295
        %v1451 = vunpack.c.h.b16 %v1295
        %v1452 = vunpack.c.l.b16 %v1296
        %v1453 = vunpack.c.l.b16 %v1297
        %v1454 = vunpack.c.h.b16 %v1297
        %v1455 = vunpack.c.l.b16 %v1298
        %v1456 = vunpack.c.l.b16 %v1299
        %v1457 = vunpack.c.h.b16 %v1299
        %v1458 = vunpack.c.l.b16 %v1300
        %v1459 = vunpack.c.l.b16 %v1301
        %v1460 = vunpack.c.h.b16 %v1301
        %v1461 = vunpack.c.l.b16 %v1302
        %v1462 = vunpack.c.l.b16 %v1303
        %v1463 = vunpack.c.h.b16 %v1303
        %v1464 = vunpack.c.l.b16 %v1304
        %v1465 = vunpack.c.l.b16 %v1305
        %v1466 = vunpack.c.h.b16 %v1305
        %v1467 = vunpack.c.l.b16 %v1306
        %v1468 = vunpack.c.l.b16 %v1307
        %v1469 = vunpack.c.h.b16 %v1307
        %v1470 = vunpack.c.l.b16 %v1308
        %v1471 = vunpack.c.l.b16 %v1309
        %v1472 = vunpack.c.h.b16 %v1309
        %v1473 = vunpack.c.l.b16 %v1310
        %v1474 = vunpack.c.l.b16 %v1311
        %v1475 = vunpack.c.h.b16 %v1311
        %v1476 = vunpack.c.l.b16 %v1312
        %v1477 = vunpack.c.l.b16 %v1313
        %v1478 = vunpack.c.h.b16 %v1313
        %v1479 = vunpack.c.l.b16 %v1314
        %v1480 = vunpack.c.l.b16 %v1315
        %v1481 = vunpack.c.h.b16 %v1315
        %v1482 = vunpack.c.l.b16 %v1316
        %v1483 = vunpack.c.l.b16 %v1317
        %v1484 = vunpack.c.h.b16 %v1317
        %v1485 = vunpack.c.l.b16 %v1318
        %v1486 = vunpack.c.l.b16 %v1319
        %v1487 = vunpack.c.h.b16 %v1319
        %v1488 = vunpack.c.l.b16 %v1320
        %v1489 = vunpack.c.l.b16 %v1321
        %v1490 = vunpack.c.h.b16 %v1321
        %v1491 = vunpack.c.l.b16 %v1322
        %v1492 = vunpack.c.l.b16 %v1323
        %v1493 = vunpack.c.h.b16 %v1323
        %v1494 = vunpack.c.l.b16 %v1324
        %v1495 = vunpack.c.l.b16 %v1325
        %v1496 = vunpack.c.h.b16 %v1325
        %v1497 = vunpack.c.l.b16 %v1326
        %v1498 = vunpack.c.l.b16 %v1327
        %v1499 = vunpack.c.h.b16 %v1327
        %v1500 = vunpack.c.l.b16 %v1328
        %v1501 = vunpack.c.l.b16 %v1329
        %v1502 = vunpack.c.h.b16 %v1329
        %v1503 = vunpack.c.l.b16 %v1330
        %v1504 = vpack.c.b16 %v1411, %v1408
        %v1505 = vpack.c.b16 %v1412, %v1409
        %v1506 = vpack.c.b16 %v1413, %v1410
        %v1507 = vpack.c.b16 %v1417, %v1414
        %v1508 = vpack.c.b16 %v1418, %v1415
        %v1509 = vpack.c.b16 %v1419, %v1416
        %v1510 = vpack.c.b16 %v1423, %v1420
        %v1511 = vpack.c.b16 %v1424, %v1421
        %v1512 = vpack.c.b16 %v1425, %v1422
        %v1513 = vpack.c.b16 %v1429, %v1426
        %v1514 = vpack.c.b16 %v1430, %v1427
        %v1515 = vpack.c.b16 %v1431, %v1428
        %v1516 = vpack.c.b16 %v1435, %v1432
        %v1517 = vpack.c.b16 %v1436, %v1433
        %v1518 = vpack.c.b16 %v1437, %v1434
        %v1519 = vpack.c.b16 %v1441, %v1438
        %v1520 = vpack.c.b16 %v1442, %v1439
        %v1521 = vpack.c.b16 %v1443, %v1440
        %v1522 = vpack.c.b16 %v1447, %v1444
        %v1523 = vpack.c.b16 %v1448, %v1445
        %v1524 = vpack.c.b16 %v1449, %v1446
        %v1525 = vpack.c.b16 %v1453, %v1450
        %v1526 = vpack.c.b16 %v1454, %v1451
        %v1527 = vpack.c.b16 %v1455, %v1452
        %v1528 = vpack.c.b16 %v1459, %v1456
        %v1529 = vpack.c.b16 %v1460, %v1457
        %v1530 = vpack.c.b16 %v1461, %v1458
        %v1531 = vpack.c.b16 %v1465, %v1462
        %v1532 = vpack.c.b16 %v1466, %v1463
        %v1533 = vpack.c.b16 %v1467, %v1464
        %v1534 = vpack.c.b16 %v1471, %v1468
        %v1535 = vpack.c.b16 %v1472, %v1469
        %v1536 = vpack.c.b16 %v1473, %v1470
        %v1537 = vpack.c.b16 %v1477, %v1474
        %v1538 = vpack.c.b16 %v1478, %v1475
        %v1539 = vpack.c.b16 %v1479, %v1476
        %v1540 = vpack.c.b16 %v1483, %v1480
        %v1541 = vpack.c.b16 %v1484, %v1481
        %v1542 = vpack.c.b16 %v1485, %v1482
        %v1543 = vpack.c.b16 %v1489, %v1486
        %v1544 = vpack.c.b16 %v1490, %v1487
        %v1545 = vpack.c.b16 %v1491, %v1488
        %v1546 = vpack.c.b16 %v1495, %v1492
        %v1547 = vpack.c.b16 %v1496, %v1493
        %v1548 = vpack.c.b16 %v1497, %v1494
        %v1549 = vpack.c.b16 %v1501, %v1498
        %v1550 = vpack.c.b16 %v1502, %v1499
        %v1551 = vpack.c.b16 %v1503, %v1500
        %1600 = vmatpush.bf16.msra.mxu0 %v1525
        %1601 = vmatpush.bf16.msra.mxu0 %v1522
        %1602 = vmatpush.bf16.msra.mxu0 %v1519
        %1603 = vmatpush.bf16.msra.mxu0 %v1516
        %1604 = vmatpush.bf16.msra.mxu0 %v1513
        %1605 = vmatpush.bf16.msra.mxu0 %v1510
        %1606 = vmatpush.bf16.msra.mxu0 %v1507
        %1607 = vmatpush.bf16.msra.mxu0 %v1504
        %1608 = vmatmul.bf16.gmra.mxu0 %v1340
        %v1609 = vpop.f32.mrf.mxu0
        %v1610 = vadd.f32 %v1335, %v1609
        %v1611 = vpop.f32.mrf.mxu0
        %1612 = vdwg.mxu0
        %1613 = vmatpush.bf16.msra.mxu0 %v1549
        %1614 = vmatpush.bf16.msra.mxu0 %v1546
        %1615 = vmatpush.bf16.msra.mxu0 %v1543
        %1616 = vmatpush.bf16.msra.mxu0 %v1540
        %1617 = vmatpush.bf16.msra.mxu0 %v1537
        %1618 = vmatpush.bf16.msra.mxu0 %v1534
        %1619 = vmatpush.bf16.msra.mxu0 %v1531
        %1620 = vmatpush.bf16.msra.mxu0 %v1528
        %1621 = vmatmul.bf16.gmra.mxu0 %v1341
        %v1622 = vpop.f32.mrf.mxu0
        %v1623 = vadd.f32 %v1610, %v1622
        %v1624 = vpop.f32.mrf.mxu0
        %1625 = vdwg.mxu0
        %1626 = vmatpush.bf16.msra.mxu0 %v1526
        %1627 = vmatpush.bf16.msra.mxu0 %v1523
        %1628 = vmatpush.bf16.msra.mxu0 %v1520
        %1629 = vmatpush.bf16.msra.mxu0 %v1517
        %1630 = vmatpush.bf16.msra.mxu0 %v1514
        %1631 = vmatpush.bf16.msra.mxu0 %v1511
        %1632 = vmatpush.bf16.msra.mxu0 %v1508
        %1633 = vmatpush.bf16.msra.mxu0 %v1505
        %1634 = vmatmul.bf16.gmra.mxu0 %v1340
        %v1635 = vpop.f32.mrf.mxu0
        %v1636 = vadd.f32 %v1335, %v1635
        %v1637 = vpop.f32.mrf.mxu0
        %1638 = vdwg.mxu0
        %1639 = vmatpush.bf16.msra.mxu0 %v1550
        %1640 = vmatpush.bf16.msra.mxu0 %v1547
        %1641 = vmatpush.bf16.msra.mxu0 %v1544
        %1642 = vmatpush.bf16.msra.mxu0 %v1541
        %1643 = vmatpush.bf16.msra.mxu0 %v1538
        %1644 = vmatpush.bf16.msra.mxu0 %v1535
        %1645 = vmatpush.bf16.msra.mxu0 %v1532
        %1646 = vmatpush.bf16.msra.mxu0 %v1529
        %1647 = vmatmul.bf16.gmra.mxu0 %v1341
        %v1648 = vpop.f32.mrf.mxu0
        %v1649 = vadd.f32 %v1636, %v1648
        %v1650 = vpop.f32.mrf.mxu0
        %1651 = vdwg.mxu0
        %1652 = vmatpush.bf16.msra.mxu0 %v1527
        %1653 = vmatpush.bf16.msra.mxu0 %v1524
        %1654 = vmatpush.bf16.msra.mxu0 %v1521
        %1655 = vmatpush.bf16.msra.mxu0 %v1518
        %1656 = vmatpush.bf16.msra.mxu0 %v1515
        %1657 = vmatpush.bf16.msra.mxu0 %v1512
        %1658 = vmatpush.bf16.msra.mxu0 %v1509
        %1659 = vmatpush.bf16.msra.mxu0 %v1506
        %1660 = vmatmul.bf16.gmra.mxu0 %v1340
        %v1661 = vpop.f32.mrf.mxu0
        %v1662 = vadd.f32 %v1335, %v1661
        %v1663 = vpop.f32.mrf.mxu0
        %1664 = vdwg.mxu0
        %1665 = vmatpush.bf16.msra.mxu0 %v1551
        %1666 = vmatpush.bf16.msra.mxu0 %v1548
        %1667 = vmatpush.bf16.msra.mxu0 %v1545
        %1668 = vmatpush.bf16.msra.mxu0 %v1542
        %1669 = vmatpush.bf16.msra.mxu0 %v1539
        %1670 = vmatpush.bf16.msra.mxu0 %v1536
        %1671 = vmatpush.bf16.msra.mxu0 %v1533
        %1672 = vmatpush.bf16.msra.mxu0 %v1530
        %1673 = vmatmul.bf16.gmra.mxu0 %v1341
        %v1674 = vpop.f32.mrf.mxu0
        %v1675 = vadd.f32 %v1662, %v1674
        %v1676 = vpop.f32.mrf.mxu0
        %1677 = vdwg.mxu0
        %v1678 = vmax.f32 %v1623, 0.0
        %v1679 = vmax.f32 %v1649, 0.0
        %v1680 = vmax.f32 %v1675, 0.0
        %v1681 = vpack.c.bf16 %v1679, %v1678
        %v1682 = vpack.c.bf16 %v1680, %v1680
        %1683 = vst [vmem:[%s610] sm:$0xff] %v1681
        %1684 = vst [vmem:[%s610 + $0x8] sm:$0xf] %v1682
        %s1685 = smul.u32 3, %s20
        %p1686 = scmp.lt.s32.totalorder %s19, 1
        %s1687 = scalar_select %p1686, %s19, 1
        %p1688 = scmp.lt.s32.totalorder %s1685, 5
        %s1689 = scalar_select %p1688, %s1685, 5
        %s1690 = smul.addr %s1687, 6
        %s1691 = sadd.s32 %s1689, %s1690
        %s1692 = smul.addr %s1691, 4
        %s1693 = scalar_lea.vmem %s4, %s1692
        // Predicated region
        $region144: #{basic_block_forward.1} parent=134 // pred_check
          %p1694 = pneg %p149
        $region145: #{basic_block_forward.1} parent=134 // pred_check_branch
          %1696 = sbr.rel (%p1694) target = $region147
        $region146: #{basic_block_forward.1} parent=134 // pred_region
          %s1697 = smul.u32 3, %s20
        $region147: #{basic_block_forward.1} parent=134 // pred_fallthru
          _
      $region135: #{basic_block_forward.1} parent=5 // pred_fallthru
        _
      %p1698 = scmp.le.s32.totalorder 2, %s10
      // Predicated region
      $region148: #{basic_block_forward.1} parent=5 // pred_check
        %p1699 = pneg %p1698
      $region149: #{basic_block_forward.1} parent=5 // pred_check_branch
        %1701 = sbr.rel (%p1699) target = $region151
      $region150: #{basic_block_forward.1} parent=5 // pred_region
        %s1702 = ssub.s32 %s10, 2
        // Predicated region
        $region152: #{basic_block_forward.1} parent=150 // pred_check
          %p1703 = pneg %p155
        $region153: #{basic_block_forward.1} parent=150 // pred_check_branch
          %1705 = sbr.rel (%p1703) target = $region155
        $region154: #{basic_block_forward.1} parent=150 // pred_region
          %s1706 = smul.u32 3, %s22
          %p1707 = scmp.lt.s32.totalorder %s21, 1
          %s1708 = scalar_select %p1707, %s21, 1
          %p1709 = scmp.lt.s32.totalorder %s1706, 5
          %s1710 = scalar_select %p1709, %s1706, 5
          %s1711 = smul.addr %s1708, 6
          %s1712 = sadd.s32 %s1710, %s1711
          %s1713 = smul.addr %s1712, 4
          %s1714 = scalar_lea.vmem %s4, %s1713
        $region155: #{basic_block_forward.1} parent=150 // pred_fallthru
          _
      $region151: #{basic_block_forward.1} parent=5 // pred_fallthru
        _
    $region6: #{basic_block_forward.1} parent=1 // loop_footer
      %s14 = sadd.s32 1, %s10
    $region7: #{basic_block_forward.1} parent=1 // loop_footer_branch
      %9 = sbr.rel target = $region3
    $region8: #{basic_block_forward.1} parent=1 // loop_exit
      _

</llo_original>
